<compile_context>
chip_gen: v7x
topology: tpu7x:2x2x1
jax: 0.10.0
libtpu: 0.0.40
codegen_flags: <defaults>
</compile_context>

<pallas_src>
import math

import jax
import jax.numpy as jnp
from jax.experimental import pallas as pl
from jax.experimental.pallas import tpu as pltpu

# ----- small config consistent with the module's forward -----
B, S = 2, 8              # batch, sequence length
T = B * S                # folded token rows
H = 32                   # hidden size
NH, DH = 2, 16           # attention heads, head dim
I = 64                   # FFN intermediate size
L = 2                    # encoder layers
VOCAB = 128
TYPE_VOCAB = 2
MAX_POS = 16
NUM_CLASSES = 3
NUM_CLASSES_PAD = 128    # lane-dense classifier head; sliced back to 3 outside
LANES = 128
LN_EPS = 1e-12
ATTN_SCALE = 1.0 / math.sqrt(DH)
INV_SQRT2 = 1.0 / math.sqrt(2.0)

# ---------------- packed parameter slab layout (static row offsets) ----------------
# per-layer bf16 matmul-weight slab (L, ROWS_W, 128); every matrix padded to 128 lanes,
# stacked along rows; all offsets are multiples of 16 (clean bf16 sublane packing).
WQ_OFF = 0                      # NH blocks of H rows x DH cols
WK_OFF = WQ_OFF + NH * H
WV_OFF = WK_OFF + NH * H
WO_OFF = WV_OFF + NH * H        # NH blocks of DH rows x H cols
W1_OFF = WO_OFF + NH * DH       # H rows x I cols
W2_OFF = W1_OFF + H             # I rows x H cols
ROWS_W = W2_OFF + I             # = 320

# per-layer f32 bias / LayerNorm slab (L, ROWS_B, 128); one vector per row.
BQ_ROW = 0                      # NH rows (DH wide each)
BK_ROW = BQ_ROW + NH
BV_ROW = BK_ROW + NH
BO_ROW = BV_ROW + NH            # 6
LN1G_ROW, LN1B_ROW = 7, 8
B1_ROW, B2_ROW = 9, 10
LN2G_ROW, LN2B_ROW = 11, 12
ROWS_B = 16

# head slabs: pooler + classifier weights (bf16, rows-stacked) and misc f32 vectors.
EMB_LNG_ROW, EMB_LNB_ROW, POOLB_ROW, FCB_ROW = 0, 1, 2, 3


# --------------------------- in-kernel helpers ------------------------------
def _ln(h, g, b):
    """LayerNorm over last dim, f32 math."""
    mu = jnp.mean(h, axis=-1, keepdims=True)
    var = jnp.mean(jnp.square(h - mu), axis=-1, keepdims=True)
    return (h - mu) * jax.lax.rsqrt(var + LN_EPS) * g + b


def _mm(a, w_bf16):
    """MXU matmul: bf16 operands, explicit f32 accumulation."""
    return jnp.dot(a.astype(jnp.bfloat16), w_bf16, preferred_element_type=jnp.float32)


# --------------------------- fused forward kernel ---------------------------
def bert_fused_kernel(emb_ref, mask_ref, wslab_ref, bslab_ref, hw_ref, hb_ref, out_ref):
    def wmat(li, row, nrows, ncols):
        # static ref-view slice of the packed bf16 weight slab (no lane shuffles)
        return wslab_ref[li, row:row + nrows, :ncols]

    def bvec(li, row, ncols):
        return bslab_ref[li, row:row + 1, :ncols]          # (1, ncols) f32

    x = emb_ref[...]                                       # (T, H) f32, whole batch folded
    x = _ln(x, hb_ref[EMB_LNG_ROW:EMB_LNG_ROW + 1, :H],
            hb_ref[EMB_LNB_ROW:EMB_LNB_ROW + 1, :H])       # embedding LayerNorm

    add_mask = mask_ref[...]                               # (T, T) block-diag + key padding

    for li in range(L):                                    # L small & static -> unrolled
        x_bf = x.astype(jnp.bfloat16)
        attn = jnp.zeros((T, H), jnp.float32)
        for h in range(NH):                                # per-head weights: row-block indexed
            q = _mm(x_bf, wmat(li, WQ_OFF + h * H, H, DH)) + bvec(li, BQ_ROW + h, DH)
            k = _mm(x_bf, wmat(li, WK_OFF + h * H, H, DH)) + bvec(li, BK_ROW + h, DH)
            v = _mm(x_bf, wmat(li, WV_OFF + h * H, H, DH)) + bvec(li, BV_ROW + h, DH)
            # scores = q @ k^T (contract DH, no explicit transpose)
            s = jax.lax.dot_general(
                q.astype(jnp.bfloat16), k.astype(jnp.bfloat16),
                (((1,), (1,)), ((), ())),
                preferred_element_type=jnp.float32) * ATTN_SCALE
            s = s + add_mask
            s = s - jnp.max(s, axis=-1, keepdims=True)
            p = jnp.exp(s)                                 # softmax in f32
            p = p * pl.reciprocal(jnp.sum(p, axis=-1, keepdims=True), approx=True)
            ctx = jnp.dot(p.astype(jnp.bfloat16), v.astype(jnp.bfloat16),
                          preferred_element_type=jnp.float32)          # (T, DH)
            # accumulate per-head output projection directly (no concat, no lane slices)
            attn = attn + _mm(ctx, wmat(li, WO_OFF + h * DH, DH, H))
        attn = attn + bvec(li, BO_ROW, H)
        x = _ln(attn + x, bvec(li, LN1G_ROW, H), bvec(li, LN1B_ROW, H))

        ff = _mm(x, wmat(li, W1_OFF, H, I)) + bvec(li, B1_ROW, I)
        # exact (erf) GELU, matching HF BERT / nn.GELU default
        ff = 0.5 * ff * (1.0 + jax.lax.erf(ff * INV_SQRT2))
        ff = _mm(ff, wmat(li, W2_OFF, I, H)) + bvec(li, B2_ROW, H)
        x = _ln(ff + x, bvec(li, LN2G_ROW, H), bvec(li, LN2B_ROW, H))

    # pooler on each example's [CLS] row; nn.Dropout(0.1) is identity at inference
    cls = jnp.concatenate([x[b * S:b * S + 1, :] for b in range(B)], axis=0)   # (B, H)
    pooled = jnp.tanh(_mm(cls, hw_ref[:H, :H]) + hb_ref[POOLB_ROW:POOLB_ROW + 1, :H])
    logits = _mm(pooled, hw_ref[H:2 * H, :]) + hb_ref[FCB_ROW:FCB_ROW + 1, :]  # (B, 128)
    out_ref[...] = logits.astype(out_ref.dtype)


# --------------------------- parameters (synthetic) -------------------------
def init_params(key):
    ks = iter(jax.random.split(key, 32))

    def rand_w(shape):
        # matmul weights stored bf16 (halves DMA bytes; f32 accumulation in-kernel)
        return (0.02 * jax.random.normal(next(ks), shape, jnp.float32)).astype(jnp.bfloat16)

    def rand_b(shape):
        return 0.01 * jax.random.normal(next(ks), shape, jnp.float32)

    # ----- logical (PyTorch-layout) parameters -----
    word_emb = 0.02 * jax.random.normal(next(ks), (VOCAB, H), jnp.float32)
    pos_emb = 0.02 * jax.random.normal(next(ks), (MAX_POS, H), jnp.float32)
    type_emb = 0.02 * jax.random.normal(next(ks), (TYPE_VOCAB, H), jnp.float32)
    emb_ln_g = jnp.ones((H,), jnp.float32)
    emb_ln_b = jnp.zeros((H,), jnp.float32)

    wq = rand_w((L, H, H)); wk = rand_w((L, H, H))
    wv = rand_w((L, H, H)); wo = rand_w((L, H, H))
    w1 = rand_w((L, H, I)); w2 = rand_w((L, I, H))
    bq = rand_b((L, H)); bk = rand_b((L, H)); bv = rand_b((L, H)); bo = rand_b((L, H))
    b1 = rand_b((L, I)); b2 = rand_b((L, H))
    ln1_g = jnp.ones((L, H), jnp.float32); ln1_b = jnp.zeros((L, H), jnp.float32)
    ln2_g = jnp.ones((L, H), jnp.float32); ln2_b = jnp.zeros((L, H), jnp.float32)

    pool_w = rand_w((H, H)); pool_b = rand_b((H,))
    fc_w = 0.02 * jax.random.normal(next(ks), (H, NUM_CLASSES), jnp.float32)
    fc_b = rand_b((NUM_CLASSES,))

    # ----- pack into a few large slabs (fewer, larger DMAs at kernel entry) -----
    wslab = jnp.zeros((L, ROWS_W, LANES), jnp.bfloat16)
    bslab = jnp.zeros((L, ROWS_B, LANES), jnp.float32)
    for li in range(L):
        for h in range(NH):
            c = slice(h * DH, (h + 1) * DH)
            wslab = wslab.at[li, WQ_OFF + h * H:WQ_OFF + (h + 1) * H, :DH].set(wq[li, :, c])
            wslab = wslab.at[li, WK_OFF + h * H:WK_OFF + (h + 1) * H, :DH].set(wk[li, :, c])
            wslab = wslab.at[li, WV_OFF + h * H:WV_OFF + (h + 1) * H, :DH].set(wv[li, :, c])
            wslab = wslab.at[li, WO_OFF + h * DH:WO_OFF + (h + 1) * DH, :H].set(wo[li, c, :])
            bslab = bslab.at[li, BQ_ROW + h, :DH].set(bq[li, c])
            bslab = bslab.at[li, BK_ROW + h, :DH].set(bk[li, c])
            bslab = bslab.at[li, BV_ROW + h, :DH].set(bv[li, c])
        wslab = wslab.at[li, W1_OFF:W1_OFF + H, :I].set(w1[li])
        wslab = wslab.at[li, W2_OFF:W2_OFF + I, :H].set(w2[li])
        bslab = bslab.at[li, BO_ROW, :H].set(bo[li])
        bslab = bslab.at[li, LN1G_ROW, :H].set(ln1_g[li])
        bslab = bslab.at[li, LN1B_ROW, :H].set(ln1_b[li])
        bslab = bslab.at[li, B1_ROW, :I].set(b1[li])
        bslab = bslab.at[li, B2_ROW, :H].set(b2[li])
        bslab = bslab.at[li, LN2G_ROW, :H].set(ln2_g[li])
        bslab = bslab.at[li, LN2B_ROW, :H].set(ln2_b[li])

    head_w = jnp.zeros((2 * H, LANES), jnp.bfloat16)
    head_w = head_w.at[:H, :H].set(pool_w)
    head_w = head_w.at[H:2 * H, :NUM_CLASSES].set(fc_w.astype(jnp.bfloat16))
    head_b = jnp.zeros((8, LANES), jnp.float32)
    head_b = head_b.at[EMB_LNG_ROW, :H].set(emb_ln_g)
    head_b = head_b.at[EMB_LNB_ROW, :H].set(emb_ln_b)
    head_b = head_b.at[POOLB_ROW, :H].set(pool_b)
    head_b = head_b.at[FCB_ROW, :NUM_CLASSES].set(fc_b)

    return {"word_emb": word_emb, "pos_emb": pos_emb, "type_emb": type_emb,
            "wslab": wslab, "bslab": bslab, "head_w": head_w, "head_b": head_b}


# ------------------------------ forward pass --------------------------------
def bert_classifier_forward(params, input_ids, attention_mask):
    # TODO(synk): embedding-table gathers (word/pos/type) stay in plain JAX; a
    # Pallas DMA-gather buys nothing at this size.
    pos_ids = jnp.arange(S)
    emb = (params["word_emb"][input_ids]
           + params["pos_emb"][pos_ids][None, :, :]
           + params["type_emb"][jnp.zeros((B, S), jnp.int32)])            # (B, S, H)
    emb = emb.reshape(T, H)                                               # fold batch into rows

    # block-diagonal additive mask: key must be in the same example AND not padding
    ex_id = jnp.arange(T) // S
    key_ok = attention_mask.reshape(T) > 0
    allowed = (ex_id[:, None] == ex_id[None, :]) & key_ok[None, :]
    add_mask = jnp.where(allowed, 0.0, -1e9).astype(jnp.float32)          # (T, T)

    def full_spec(a):
        n = a.ndim
        return pl.BlockSpec(a.shape, lambda i, n=n: (0,) * n)

    args = (emb, add_mask, params["wslab"], params["bslab"],
            params["head_w"], params["head_b"])

    logits_pad = pl.pallas_call(
        bert_fused_kernel,
        out_shape=jax.ShapeDtypeStruct((B, NUM_CLASSES_PAD), jnp.float32),
        grid=(1,),                                # whole batch in one fused step
        in_specs=[full_spec(a) for a in args],
        out_specs=pl.BlockSpec((B, NUM_CLASSES_PAD), lambda i: (0, 0)),
        compiler_params=pltpu.CompilerParams(dimension_semantics=("arbitrary",)),
    )(*args)

    # slice padded lane-dense logits back to the real number of classes
    return logits_pad[:, :NUM_CLASSES]


if __name__ == "__main__":
    key = jax.random.PRNGKey(0)
    pkey, ikey = jax.random.split(key)
    params = init_params(pkey)

    input_ids = jax.random.randint(ikey, (B, S), 0, VOCAB, dtype=jnp.int32)
    # second example has 2 padding positions at the end
    attention_mask = jnp.array(
        [[1, 1, 1, 1, 1, 1, 1, 1],
         [1, 1, 1, 1, 1, 1, 0, 0]], dtype=jnp.int32)

    logits = jax.jit(bert_classifier_forward)(params, input_ids, attention_mask)
    jax.block_until_ready(logits)
    assert logits.shape == (B, NUM_CLASSES)
    print("KERNEL_OK")
</pallas_src>

<mosaic_0001>
module attributes {stable_mosaic.version = 11 : i64} {
  func.func @bert_fused_kernel(%arg0: i32, %arg1: memref<16x32xf32, #tpu.memory_space<vmem>>, %arg2: memref<16x16xf32, #tpu.memory_space<vmem>>, %arg3: memref<2x320x128xbf16, #tpu.memory_space<vmem>>, %arg4: memref<2x16x128xf32, #tpu.memory_space<vmem>>, %arg5: memref<64x128xbf16, #tpu.memory_space<vmem>>, %arg6: memref<8x128xf32, #tpu.memory_space<vmem>>, %arg7: memref<2x128xf32, #tpu.memory_space<vmem>>) attributes {dimension_semantics = [#tpu.dimension_semantics<arbitrary>], iteration_bounds = array<i64: 1>, scalar_prefetch = 0 : i64, scratch_operands = 0 : i64, tpu.core_type = #tpu.core_type<tc>, window_params = [{pipeline_mode = #tpu.pipeline_mode<synchronous>, transform_indices = @transform_0, window_bounds = array<i64: 16, 32>}, {pipeline_mode = #tpu.pipeline_mode<synchronous>, transform_indices = @transform_1, window_bounds = array<i64: 16, 16>}, {pipeline_mode = #tpu.pipeline_mode<synchronous>, transform_indices = @transform_2, window_bounds = array<i64: 2, 320, 128>}, {pipeline_mode = #tpu.pipeline_mode<synchronous>, transform_indices = @transform_3, window_bounds = array<i64: 2, 16, 128>}, {pipeline_mode = #tpu.pipeline_mode<synchronous>, transform_indices = @transform_4, window_bounds = array<i64: 64, 128>}, {pipeline_mode = #tpu.pipeline_mode<synchronous>, transform_indices = @transform_5, window_bounds = array<i64: 8, 128>}, {pipeline_mode = #tpu.pipeline_mode<synchronous>, transform_indices = @transform_6, window_bounds = array<i64: 2, 128>}]} {
    %c0 = arith.constant 0 : index
    %c0_0 = arith.constant 0 : index
    %0 = vector.load %arg1[%c0, %c0_0] : memref<16x32xf32, #tpu.memory_space<vmem>>, vector<16x32xf32>
    %c0_1 = arith.constant 0 : index
    %c0_2 = arith.constant 0 : index
    %1 = vector.load %arg6[%c0_1, %c0_2] : memref<8x128xf32, #tpu.memory_space<vmem>>, vector<1x32xf32>
    %c1 = arith.constant 1 : index
    %c0_3 = arith.constant 0 : index
    %2 = vector.load %arg6[%c1, %c0_3] : memref<8x128xf32, #tpu.memory_space<vmem>>, vector<1x32xf32>
    %cst = arith.constant dense<0.000000e+00> : vector<16xf32>
    %3 = vector.multi_reduction <add>, %0, %cst [1] : vector<16x32xf32> to vector<16xf32>
    %4 = vector.shape_cast %3 : vector<16xf32> to vector<16x1xf32>
    %cst_4 = arith.constant 3.200000e+01 : f32
    %5 = vector.broadcast %cst_4 : f32 to vector<16x1xf32>
    %6 = arith.divf %4, %5 : vector<16x1xf32>
    %7 = vector.broadcast %6 : vector<16x1xf32> to vector<16x32xf32>
    %8 = arith.subf %0, %7 : vector<16x32xf32>
    %9 = arith.mulf %8, %8 : vector<16x32xf32>
    %cst_5 = arith.constant dense<0.000000e+00> : vector<16xf32>
    %10 = vector.multi_reduction <add>, %9, %cst_5 [1] : vector<16x32xf32> to vector<16xf32>
    %11 = vector.shape_cast %10 : vector<16xf32> to vector<16x1xf32>
    %cst_6 = arith.constant 3.200000e+01 : f32
    %12 = vector.broadcast %cst_6 : f32 to vector<16x1xf32>
    %13 = arith.divf %11, %12 : vector<16x1xf32>
    %14 = vector.broadcast %6 : vector<16x1xf32> to vector<16x32xf32>
    %15 = arith.subf %0, %14 : vector<16x32xf32>
    %cst_7 = arith.constant 9.99999996E-13 : f32
    %16 = vector.broadcast %cst_7 : f32 to vector<16x1xf32>
    %17 = arith.addf %13, %16 : vector<16x1xf32>
    %18 = math.rsqrt %17 : vector<16x1xf32>
    %19 = vector.broadcast %18 : vector<16x1xf32> to vector<16x32xf32>
    %20 = arith.mulf %15, %19 : vector<16x32xf32>
    %21 = vector.broadcast %1 : vector<1x32xf32> to vector<16x32xf32>
    %22 = arith.mulf %20, %21 : vector<16x32xf32>
    %23 = vector.broadcast %2 : vector<1x32xf32> to vector<16x32xf32>
    %24 = arith.addf %22, %23 : vector<16x32xf32>
    %c0_8 = arith.constant 0 : index
    %c0_9 = arith.constant 0 : index
    %25 = vector.load %arg2[%c0_8, %c0_9] : memref<16x16xf32, #tpu.memory_space<vmem>>, vector<16x16xf32>
    %26 = arith.truncf %24 : vector<16x32xf32> to vector<16x32xbf16>
    %cst_10 = arith.constant 0.000000e+00 : f32
    %27 = vector.broadcast %cst_10 : f32 to vector<16x32xf32>
    %c0_11 = arith.constant 0 : index
    %c0_12 = arith.constant 0 : index
    %c0_13 = arith.constant 0 : index
    %28 = vector.load %arg3[%c0_11, %c0_12, %c0_13] : memref<2x320x128xbf16, #tpu.memory_space<vmem>>, vector<1x32x16xbf16>
    %29 = vector.shape_cast %28 : vector<1x32x16xbf16> to vector<32x16xbf16>
    %cst_14 = arith.constant dense<0.000000e+00> : vector<16x16xf32>
    %30 = tpu.matmul %26, %29, %cst_14 {dimension_numbers = #tpu.dot_dimension_numbers<[1], [0], [0], [1], [0, 0, 1, 1], [], []>} : vector<16x32xbf16>, vector<32x16xbf16>, vector<16x16xf32> -> vector<16x16xf32>
    %c0_15 = arith.constant 0 : index
    %c0_16 = arith.constant 0 : index
    %c0_17 = arith.constant 0 : index
    %31 = vector.load %arg4[%c0_15, %c0_16, %c0_17] : memref<2x16x128xf32, #tpu.memory_space<vmem>>, vector<1x1x16xf32>
    %32 = vector.shape_cast %31 : vector<1x1x16xf32> to vector<1x16xf32>
    %33 = vector.broadcast %32 : vector<1x16xf32> to vector<16x16xf32>
    %34 = arith.addf %30, %33 : vector<16x16xf32>
    %c0_18 = arith.constant 0 : index
    %c64 = arith.constant 64 : index
    %c0_19 = arith.constant 0 : index
    %35 = vector.load %arg3[%c0_18, %c64, %c0_19] : memref<2x320x128xbf16, #tpu.memory_space<vmem>>, vector<1x32x16xbf16>
    %36 = vector.shape_cast %35 : vector<1x32x16xbf16> to vector<32x16xbf16>
    %cst_20 = arith.constant dense<0.000000e+00> : vector<16x16xf32>
    %37 = tpu.matmul %26, %36, %cst_20 {dimension_numbers = #tpu.dot_dimension_numbers<[1], [0], [0], [1], [0, 0, 1, 1], [], []>} : vector<16x32xbf16>, vector<32x16xbf16>, vector<16x16xf32> -> vector<16x16xf32>
    %c0_21 = arith.constant 0 : index
    %c2 = arith.constant 2 : index
    %c0_22 = arith.constant 0 : index
    %38 = vector.load %arg4[%c0_21, %c2, %c0_22] : memref<2x16x128xf32, #tpu.memory_space<vmem>>, vector<1x1x16xf32>
    %39 = vector.shape_cast %38 : vector<1x1x16xf32> to vector<1x16xf32>
    %40 = vector.broadcast %39 : vector<1x16xf32> to vector<16x16xf32>
    %41 = arith.addf %37, %40 : vector<16x16xf32>
    %c0_23 = arith.constant 0 : index
    %c128 = arith.constant 128 : index
    %c0_24 = arith.constant 0 : index
    %42 = vector.load %arg3[%c0_23, %c128, %c0_24] : memref<2x320x128xbf16, #tpu.memory_space<vmem>>, vector<1x32x16xbf16>
    %43 = vector.shape_cast %42 : vector<1x32x16xbf16> to vector<32x16xbf16>
    %cst_25 = arith.constant dense<0.000000e+00> : vector<16x16xf32>
    %44 = tpu.matmul %26, %43, %cst_25 {dimension_numbers = #tpu.dot_dimension_numbers<[1], [0], [0], [1], [0, 0, 1, 1], [], []>} : vector<16x32xbf16>, vector<32x16xbf16>, vector<16x16xf32> -> vector<16x16xf32>
    %c0_26 = arith.constant 0 : index
    %c4 = arith.constant 4 : index
    %c0_27 = arith.constant 0 : index
    %45 = vector.load %arg4[%c0_26, %c4, %c0_27] : memref<2x16x128xf32, #tpu.memory_space<vmem>>, vector<1x1x16xf32>
    %46 = vector.shape_cast %45 : vector<1x1x16xf32> to vector<1x16xf32>
    %47 = vector.broadcast %46 : vector<1x16xf32> to vector<16x16xf32>
    %48 = arith.addf %44, %47 : vector<16x16xf32>
    %49 = arith.truncf %34 : vector<16x16xf32> to vector<16x16xbf16>
    %50 = arith.truncf %41 : vector<16x16xf32> to vector<16x16xbf16>
    %cst_28 = arith.constant dense<0.000000e+00> : vector<16x16xf32>
    %51 = tpu.matmul %49, %50, %cst_28 {dimension_numbers = #tpu.dot_dimension_numbers<[1], [1], [0], [0], [0, 0, 1, 0], [], []>} : vector<16x16xbf16>, vector<16x16xbf16>, vector<16x16xf32> -> vector<16x16xf32>
    %cst_29 = arith.constant 2.500000e-01 : f32
    %52 = vector.broadcast %cst_29 : f32 to vector<16x16xf32>
    %53 = arith.mulf %51, %52 : vector<16x16xf32>
    %54 = arith.addf %53, %25 : vector<16x16xf32>
    %cst_30 = arith.constant dense<0xFF800000> : vector<16xf32>
    %55 = vector.multi_reduction <maximumf>, %54, %cst_30 [1] : vector<16x16xf32> to vector<16xf32>
    %56 = vector.shape_cast %55 : vector<16xf32> to vector<16x1xf32>
    %57 = vector.broadcast %56 : vector<16x1xf32> to vector<16x16xf32>
    %58 = arith.subf %54, %57 : vector<16x16xf32>
    %59 = math.exp %58 : vector<16x16xf32>
    %cst_31 = arith.constant dense<0.000000e+00> : vector<16xf32>
    %60 = vector.multi_reduction <add>, %59, %cst_31 [1] : vector<16x16xf32> to vector<16xf32>
    %61 = vector.shape_cast %60 : vector<16xf32> to vector<16x1xf32>
    %62 = tpu.reciprocal %61 {approx = true} : vector<16x1xf32> -> vector<16x1xf32>
    %63 = vector.broadcast %62 : vector<16x1xf32> to vector<16x16xf32>
    %64 = arith.mulf %59, %63 : vector<16x16xf32>
    %65 = arith.truncf %64 : vector<16x16xf32> to vector<16x16xbf16>
    %66 = arith.truncf %48 : vector<16x16xf32> to vector<16x16xbf16>
    %cst_32 = arith.constant dense<0.000000e+00> : vector<16x16xf32>
    %67 = tpu.matmul %65, %66, %cst_32 {dimension_numbers = #tpu.dot_dimension_numbers<[1], [0], [0], [1], [0, 0, 1, 1], [], []>} : vector<16x16xbf16>, vector<16x16xbf16>, vector<16x16xf32> -> vector<16x16xf32>
    %c0_33 = arith.constant 0 : index
    %c192 = arith.constant 192 : index
    %c0_34 = arith.constant 0 : index
    %68 = vector.load %arg3[%c0_33, %c192, %c0_34] : memref<2x320x128xbf16, #tpu.memory_space<vmem>>, vector<1x16x32xbf16>
    %69 = vector.shape_cast %68 : vector<1x16x32xbf16> to vector<16x32xbf16>
    %70 = arith.truncf %67 : vector<16x16xf32> to vector<16x16xbf16>
    %cst_35 = arith.constant dense<0.000000e+00> : vector<16x32xf32>
    %71 = tpu.matmul %70, %69, %cst_35 {dimension_numbers = #tpu.dot_dimension_numbers<[1], [0], [0], [1], [0, 0, 1, 1], [], []>} : vector<16x16xbf16>, vector<16x32xbf16>, vector<16x32xf32> -> vector<16x32xf32>
    %72 = arith.addf %27, %71 : vector<16x32xf32>
    %c0_36 = arith.constant 0 : index
    %c32 = arith.constant 32 : index
    %c0_37 = arith.constant 0 : index
    %73 = vector.load %arg3[%c0_36, %c32, %c0_37] : memref<2x320x128xbf16, #tpu.memory_space<vmem>>, vector<1x32x16xbf16>
    %74 = vector.shape_cast %73 : vector<1x32x16xbf16> to vector<32x16xbf16>
    %cst_38 = arith.constant dense<0.000000e+00> : vector<16x16xf32>
    %75 = tpu.matmul %26, %74, %cst_38 {dimension_numbers = #tpu.dot_dimension_numbers<[1], [0], [0], [1], [0, 0, 1, 1], [], []>} : vector<16x32xbf16>, vector<32x16xbf16>, vector<16x16xf32> -> vector<16x16xf32>
    %c0_39 = arith.constant 0 : index
    %c1_40 = arith.constant 1 : index
    %c0_41 = arith.constant 0 : index
    %76 = vector.load %arg4[%c0_39, %c1_40, %c0_41] : memref<2x16x128xf32, #tpu.memory_space<vmem>>, vector<1x1x16xf32>
    %77 = vector.shape_cast %76 : vector<1x1x16xf32> to vector<1x16xf32>
    %78 = vector.broadcast %77 : vector<1x16xf32> to vector<16x16xf32>
    %79 = arith.addf %75, %78 : vector<16x16xf32>
    %c0_42 = arith.constant 0 : index
    %c96 = arith.constant 96 : index
    %c0_43 = arith.constant 0 : index
    %80 = vector.load %arg3[%c0_42, %c96, %c0_43] : memref<2x320x128xbf16, #tpu.memory_space<vmem>>, vector<1x32x16xbf16>
    %81 = vector.shape_cast %80 : vector<1x32x16xbf16> to vector<32x16xbf16>
    %cst_44 = arith.constant dense<0.000000e+00> : vector<16x16xf32>
    %82 = tpu.matmul %26, %81, %cst_44 {dimension_numbers = #tpu.dot_dimension_numbers<[1], [0], [0], [1], [0, 0, 1, 1], [], []>} : vector<16x32xbf16>, vector<32x16xbf16>, vector<16x16xf32> -> vector<16x16xf32>
    %c0_45 = arith.constant 0 : index
    %c3 = arith.constant 3 : index
    %c0_46 = arith.constant 0 : index
    %83 = vector.load %arg4[%c0_45, %c3, %c0_46] : memref<2x16x128xf32, #tpu.memory_space<vmem>>, vector<1x1x16xf32>
    %84 = vector.shape_cast %83 : vector<1x1x16xf32> to vector<1x16xf32>
    %85 = vector.broadcast %84 : vector<1x16xf32> to vector<16x16xf32>
    %86 = arith.addf %82, %85 : vector<16x16xf32>
    %c0_47 = arith.constant 0 : index
    %c160 = arith.constant 160 : index
    %c0_48 = arith.constant 0 : index
    %87 = vector.load %arg3[%c0_47, %c160, %c0_48] : memref<2x320x128xbf16, #tpu.memory_space<vmem>>, vector<1x32x16xbf16>
    %88 = vector.shape_cast %87 : vector<1x32x16xbf16> to vector<32x16xbf16>
    %cst_49 = arith.constant dense<0.000000e+00> : vector<16x16xf32>
    %89 = tpu.matmul %26, %88, %cst_49 {dimension_numbers = #tpu.dot_dimension_numbers<[1], [0], [0], [1], [0, 0, 1, 1], [], []>} : vector<16x32xbf16>, vector<32x16xbf16>, vector<16x16xf32> -> vector<16x16xf32>
    %c0_50 = arith.constant 0 : index
    %c5 = arith.constant 5 : index
    %c0_51 = arith.constant 0 : index
    %90 = vector.load %arg4[%c0_50, %c5, %c0_51] : memref<2x16x128xf32, #tpu.memory_space<vmem>>, vector<1x1x16xf32>
    %91 = vector.shape_cast %90 : vector<1x1x16xf32> to vector<1x16xf32>
    %92 = vector.broadcast %91 : vector<1x16xf32> to vector<16x16xf32>
    %93 = arith.addf %89, %92 : vector<16x16xf32>
    %94 = arith.truncf %79 : vector<16x16xf32> to vector<16x16xbf16>
    %95 = arith.truncf %86 : vector<16x16xf32> to vector<16x16xbf16>
    %cst_52 = arith.constant dense<0.000000e+00> : vector<16x16xf32>
    %96 = tpu.matmul %94, %95, %cst_52 {dimension_numbers = #tpu.dot_dimension_numbers<[1], [1], [0], [0], [0, 0, 1, 0], [], []>} : vector<16x16xbf16>, vector<16x16xbf16>, vector<16x16xf32> -> vector<16x16xf32>
    %cst_53 = arith.constant 2.500000e-01 : f32
    %97 = vector.broadcast %cst_53 : f32 to vector<16x16xf32>
    %98 = arith.mulf %96, %97 : vector<16x16xf32>
    %99 = arith.addf %98, %25 : vector<16x16xf32>
    %cst_54 = arith.constant dense<0xFF800000> : vector<16xf32>
    %100 = vector.multi_reduction <maximumf>, %99, %cst_54 [1] : vector<16x16xf32> to vector<16xf32>
    %101 = vector.shape_cast %100 : vector<16xf32> to vector<16x1xf32>
    %102 = vector.broadcast %101 : vector<16x1xf32> to vector<16x16xf32>
    %103 = arith.subf %99, %102 : vector<16x16xf32>
    %104 = math.exp %103 : vector<16x16xf32>
    %cst_55 = arith.constant dense<0.000000e+00> : vector<16xf32>
    %105 = vector.multi_reduction <add>, %104, %cst_55 [1] : vector<16x16xf32> to vector<16xf32>
    %106 = vector.shape_cast %105 : vector<16xf32> to vector<16x1xf32>
    %107 = tpu.reciprocal %106 {approx = true} : vector<16x1xf32> -> vector<16x1xf32>
    %108 = vector.broadcast %107 : vector<16x1xf32> to vector<16x16xf32>
    %109 = arith.mulf %104, %108 : vector<16x16xf32>
    %110 = arith.truncf %109 : vector<16x16xf32> to vector<16x16xbf16>
    %111 = arith.truncf %93 : vector<16x16xf32> to vector<16x16xbf16>
    %cst_56 = arith.constant dense<0.000000e+00> : vector<16x16xf32>
    %112 = tpu.matmul %110, %111, %cst_56 {dimension_numbers = #tpu.dot_dimension_numbers<[1], [0], [0], [1], [0, 0, 1, 1], [], []>} : vector<16x16xbf16>, vector<16x16xbf16>, vector<16x16xf32> -> vector<16x16xf32>
    %c0_57 = arith.constant 0 : index
    %c208 = arith.constant 208 : index
    %c0_58 = arith.constant 0 : index
    %113 = vector.load %arg3[%c0_57, %c208, %c0_58] : memref<2x320x128xbf16, #tpu.memory_space<vmem>>, vector<1x16x32xbf16>
    %114 = vector.shape_cast %113 : vector<1x16x32xbf16> to vector<16x32xbf16>
    %115 = arith.truncf %112 : vector<16x16xf32> to vector<16x16xbf16>
    %cst_59 = arith.constant dense<0.000000e+00> : vector<16x32xf32>
    %116 = tpu.matmul %115, %114, %cst_59 {dimension_numbers = #tpu.dot_dimension_numbers<[1], [0], [0], [1], [0, 0, 1, 1], [], []>} : vector<16x16xbf16>, vector<16x32xbf16>, vector<16x32xf32> -> vector<16x32xf32>
    %117 = arith.addf %72, %116 : vector<16x32xf32>
    %c0_60 = arith.constant 0 : index
    %c6 = arith.constant 6 : index
    %c0_61 = arith.constant 0 : index
    %118 = vector.load %arg4[%c0_60, %c6, %c0_61] : memref<2x16x128xf32, #tpu.memory_space<vmem>>, vector<1x1x32xf32>
    %119 = vector.shape_cast %118 : vector<1x1x32xf32> to vector<1x32xf32>
    %120 = vector.broadcast %119 : vector<1x32xf32> to vector<16x32xf32>
    %121 = arith.addf %117, %120 : vector<16x32xf32>
    %122 = arith.addf %121, %24 : vector<16x32xf32>
    %c0_62 = arith.constant 0 : index
    %c7 = arith.constant 7 : index
    %c0_63 = arith.constant 0 : index
    %123 = vector.load %arg4[%c0_62, %c7, %c0_63] : memref<2x16x128xf32, #tpu.memory_space<vmem>>, vector<1x1x32xf32>
    %124 = vector.shape_cast %123 : vector<1x1x32xf32> to vector<1x32xf32>
    %c0_64 = arith.constant 0 : index
    %c8 = arith.constant 8 : index
    %c0_65 = arith.constant 0 : index
    %125 = vector.load %arg4[%c0_64, %c8, %c0_65] : memref<2x16x128xf32, #tpu.memory_space<vmem>>, vector<1x1x32xf32>
    %126 = vector.shape_cast %125 : vector<1x1x32xf32> to vector<1x32xf32>
    %cst_66 = arith.constant dense<0.000000e+00> : vector<16xf32>
    %127 = vector.multi_reduction <add>, %122, %cst_66 [1] : vector<16x32xf32> to vector<16xf32>
    %128 = vector.shape_cast %127 : vector<16xf32> to vector<16x1xf32>
    %cst_67 = arith.constant 3.200000e+01 : f32
    %129 = vector.broadcast %cst_67 : f32 to vector<16x1xf32>
    %130 = arith.divf %128, %129 : vector<16x1xf32>
    %131 = vector.broadcast %130 : vector<16x1xf32> to vector<16x32xf32>
    %132 = arith.subf %122, %131 : vector<16x32xf32>
    %133 = arith.mulf %132, %132 : vector<16x32xf32>
    %cst_68 = arith.constant dense<0.000000e+00> : vector<16xf32>
    %134 = vector.multi_reduction <add>, %133, %cst_68 [1] : vector<16x32xf32> to vector<16xf32>
    %135 = vector.shape_cast %134 : vector<16xf32> to vector<16x1xf32>
    %cst_69 = arith.constant 3.200000e+01 : f32
    %136 = vector.broadcast %cst_69 : f32 to vector<16x1xf32>
    %137 = arith.divf %135, %136 : vector<16x1xf32>
    %138 = vector.broadcast %130 : vector<16x1xf32> to vector<16x32xf32>
    %139 = arith.subf %122, %138 : vector<16x32xf32>
    %cst_70 = arith.constant 9.99999996E-13 : f32
    %140 = vector.broadcast %cst_70 : f32 to vector<16x1xf32>
    %141 = arith.addf %137, %140 : vector<16x1xf32>
    %142 = math.rsqrt %141 : vector<16x1xf32>
    %143 = vector.broadcast %142 : vector<16x1xf32> to vector<16x32xf32>
    %144 = arith.mulf %139, %143 : vector<16x32xf32>
    %145 = vector.broadcast %124 : vector<1x32xf32> to vector<16x32xf32>
    %146 = arith.mulf %144, %145 : vector<16x32xf32>
    %147 = vector.broadcast %126 : vector<1x32xf32> to vector<16x32xf32>
    %148 = arith.addf %146, %147 : vector<16x32xf32>
    %c0_71 = arith.constant 0 : index
    %c224 = arith.constant 224 : index
    %c0_72 = arith.constant 0 : index
    %149 = vector.load %arg3[%c0_71, %c224, %c0_72] : memref<2x320x128xbf16, #tpu.memory_space<vmem>>, vector<1x32x64xbf16>
    %150 = vector.shape_cast %149 : vector<1x32x64xbf16> to vector<32x64xbf16>
    %151 = arith.truncf %148 : vector<16x32xf32> to vector<16x32xbf16>
    %cst_73 = arith.constant dense<0.000000e+00> : vector<16x64xf32>
    %152 = tpu.matmul %151, %150, %cst_73 {dimension_numbers = #tpu.dot_dimension_numbers<[1], [0], [0], [1], [0, 0, 1, 1], [], []>} : vector<16x32xbf16>, vector<32x64xbf16>, vector<16x64xf32> -> vector<16x64xf32>
    %c0_74 = arith.constant 0 : index
    %c9 = arith.constant 9 : index
    %c0_75 = arith.constant 0 : index
    %153 = vector.load %arg4[%c0_74, %c9, %c0_75] : memref<2x16x128xf32, #tpu.memory_space<vmem>>, vector<1x1x64xf32>
    %154 = vector.shape_cast %153 : vector<1x1x64xf32> to vector<1x64xf32>
    %155 = vector.broadcast %154 : vector<1x64xf32> to vector<16x64xf32>
    %156 = arith.addf %152, %155 : vector<16x64xf32>
    %cst_76 = arith.constant 5.000000e-01 : f32
    %157 = vector.broadcast %cst_76 : f32 to vector<16x64xf32>
    %158 = arith.mulf %157, %156 : vector<16x64xf32>
    %cst_77 = arith.constant 0.707106769 : f32
    %159 = vector.broadcast %cst_77 : f32 to vector<16x64xf32>
    %160 = arith.mulf %156, %159 : vector<16x64xf32>
    %161 = math.erf %160 : vector<16x64xf32>
    %cst_78 = arith.constant 1.000000e+00 : f32
    %162 = vector.broadcast %cst_78 : f32 to vector<16x64xf32>
    %163 = arith.addf %162, %161 : vector<16x64xf32>
    %164 = arith.mulf %158, %163 : vector<16x64xf32>
    %c0_79 = arith.constant 0 : index
    %c256 = arith.constant 256 : index
    %c0_80 = arith.constant 0 : index
    %165 = vector.load %arg3[%c0_79, %c256, %c0_80] : memref<2x320x128xbf16, #tpu.memory_space<vmem>>, vector<1x64x32xbf16>
    %166 = vector.shape_cast %165 : vector<1x64x32xbf16> to vector<64x32xbf16>
    %167 = arith.truncf %164 : vector<16x64xf32> to vector<16x64xbf16>
    %cst_81 = arith.constant dense<0.000000e+00> : vector<16x32xf32>
    %168 = tpu.matmul %167, %166, %cst_81 {dimension_numbers = #tpu.dot_dimension_numbers<[1], [0], [0], [1], [0, 0, 1, 1], [], []>} : vector<16x64xbf16>, vector<64x32xbf16>, vector<16x32xf32> -> vector<16x32xf32>
    %c0_82 = arith.constant 0 : index
    %c10 = arith.constant 10 : index
    %c0_83 = arith.constant 0 : index
    %169 = vector.load %arg4[%c0_82, %c10, %c0_83] : memref<2x16x128xf32, #tpu.memory_space<vmem>>, vector<1x1x32xf32>
    %170 = vector.shape_cast %169 : vector<1x1x32xf32> to vector<1x32xf32>
    %171 = vector.broadcast %170 : vector<1x32xf32> to vector<16x32xf32>
    %172 = arith.addf %168, %171 : vector<16x32xf32>
    %173 = arith.addf %172, %148 : vector<16x32xf32>
    %c0_84 = arith.constant 0 : index
    %c11 = arith.constant 11 : index
    %c0_85 = arith.constant 0 : index
    %174 = vector.load %arg4[%c0_84, %c11, %c0_85] : memref<2x16x128xf32, #tpu.memory_space<vmem>>, vector<1x1x32xf32>
    %175 = vector.shape_cast %174 : vector<1x1x32xf32> to vector<1x32xf32>
    %c0_86 = arith.constant 0 : index
    %c12 = arith.constant 12 : index
    %c0_87 = arith.constant 0 : index
    %176 = vector.load %arg4[%c0_86, %c12, %c0_87] : memref<2x16x128xf32, #tpu.memory_space<vmem>>, vector<1x1x32xf32>
    %177 = vector.shape_cast %176 : vector<1x1x32xf32> to vector<1x32xf32>
    %cst_88 = arith.constant dense<0.000000e+00> : vector<16xf32>
    %178 = vector.multi_reduction <add>, %173, %cst_88 [1] : vector<16x32xf32> to vector<16xf32>
    %179 = vector.shape_cast %178 : vector<16xf32> to vector<16x1xf32>
    %cst_89 = arith.constant 3.200000e+01 : f32
    %180 = vector.broadcast %cst_89 : f32 to vector<16x1xf32>
    %181 = arith.divf %179, %180 : vector<16x1xf32>
    %182 = vector.broadcast %181 : vector<16x1xf32> to vector<16x32xf32>
    %183 = arith.subf %173, %182 : vector<16x32xf32>
    %184 = arith.mulf %183, %183 : vector<16x32xf32>
    %cst_90 = arith.constant dense<0.000000e+00> : vector<16xf32>
    %185 = vector.multi_reduction <add>, %184, %cst_90 [1] : vector<16x32xf32> to vector<16xf32>
    %186 = vector.shape_cast %185 : vector<16xf32> to vector<16x1xf32>
    %cst_91 = arith.constant 3.200000e+01 : f32
    %187 = vector.broadcast %cst_91 : f32 to vector<16x1xf32>
    %188 = arith.divf %186, %187 : vector<16x1xf32>
    %189 = vector.broadcast %181 : vector<16x1xf32> to vector<16x32xf32>
    %190 = arith.subf %173, %189 : vector<16x32xf32>
    %cst_92 = arith.constant 9.99999996E-13 : f32
    %191 = vector.broadcast %cst_92 : f32 to vector<16x1xf32>
    %192 = arith.addf %188, %191 : vector<16x1xf32>
    %193 = math.rsqrt %192 : vector<16x1xf32>
    %194 = vector.broadcast %193 : vector<16x1xf32> to vector<16x32xf32>
    %195 = arith.mulf %190, %194 : vector<16x32xf32>
    %196 = vector.broadcast %175 : vector<1x32xf32> to vector<16x32xf32>
    %197 = arith.mulf %195, %196 : vector<16x32xf32>
    %198 = vector.broadcast %177 : vector<1x32xf32> to vector<16x32xf32>
    %199 = arith.addf %197, %198 : vector<16x32xf32>
    %200 = arith.truncf %199 : vector<16x32xf32> to vector<16x32xbf16>
    %cst_93 = arith.constant 0.000000e+00 : f32
    %201 = vector.broadcast %cst_93 : f32 to vector<16x32xf32>
    %c1_94 = arith.constant 1 : index
    %c0_95 = arith.constant 0 : index
    %c0_96 = arith.constant 0 : index
    %202 = vector.load %arg3[%c1_94, %c0_95, %c0_96] : memref<2x320x128xbf16, #tpu.memory_space<vmem>>, vector<1x32x16xbf16>
    %203 = vector.shape_cast %202 : vector<1x32x16xbf16> to vector<32x16xbf16>
    %cst_97 = arith.constant dense<0.000000e+00> : vector<16x16xf32>
    %204 = tpu.matmul %200, %203, %cst_97 {dimension_numbers = #tpu.dot_dimension_numbers<[1], [0], [0], [1], [0, 0, 1, 1], [], []>} : vector<16x32xbf16>, vector<32x16xbf16>, vector<16x16xf32> -> vector<16x16xf32>
    %c1_98 = arith.constant 1 : index
    %c0_99 = arith.constant 0 : index
    %c0_100 = arith.constant 0 : index
    %205 = vector.load %arg4[%c1_98, %c0_99, %c0_100] : memref<2x16x128xf32, #tpu.memory_space<vmem>>, vector<1x1x16xf32>
    %206 = vector.shape_cast %205 : vector<1x1x16xf32> to vector<1x16xf32>
    %207 = vector.broadcast %206 : vector<1x16xf32> to vector<16x16xf32>
    %208 = arith.addf %204, %207 : vector<16x16xf32>
    %c1_101 = arith.constant 1 : index
    %c64_102 = arith.constant 64 : index
    %c0_103 = arith.constant 0 : index
    %209 = vector.load %arg3[%c1_101, %c64_102, %c0_103] : memref<2x320x128xbf16, #tpu.memory_space<vmem>>, vector<1x32x16xbf16>
    %210 = vector.shape_cast %209 : vector<1x32x16xbf16> to vector<32x16xbf16>
    %cst_104 = arith.constant dense<0.000000e+00> : vector<16x16xf32>
    %211 = tpu.matmul %200, %210, %cst_104 {dimension_numbers = #tpu.dot_dimension_numbers<[1], [0], [0], [1], [0, 0, 1, 1], [], []>} : vector<16x32xbf16>, vector<32x16xbf16>, vector<16x16xf32> -> vector<16x16xf32>
    %c1_105 = arith.constant 1 : index
    %c2_106 = arith.constant 2 : index
    %c0_107 = arith.constant 0 : index
    %212 = vector.load %arg4[%c1_105, %c2_106, %c0_107] : memref<2x16x128xf32, #tpu.memory_space<vmem>>, vector<1x1x16xf32>
    %213 = vector.shape_cast %212 : vector<1x1x16xf32> to vector<1x16xf32>
    %214 = vector.broadcast %213 : vector<1x16xf32> to vector<16x16xf32>
    %215 = arith.addf %211, %214 : vector<16x16xf32>
    %c1_108 = arith.constant 1 : index
    %c128_109 = arith.constant 128 : index
    %c0_110 = arith.constant 0 : index
    %216 = vector.load %arg3[%c1_108, %c128_109, %c0_110] : memref<2x320x128xbf16, #tpu.memory_space<vmem>>, vector<1x32x16xbf16>
    %217 = vector.shape_cast %216 : vector<1x32x16xbf16> to vector<32x16xbf16>
    %cst_111 = arith.constant dense<0.000000e+00> : vector<16x16xf32>
    %218 = tpu.matmul %200, %217, %cst_111 {dimension_numbers = #tpu.dot_dimension_numbers<[1], [0], [0], [1], [0, 0, 1, 1], [], []>} : vector<16x32xbf16>, vector<32x16xbf16>, vector<16x16xf32> -> vector<16x16xf32>
    %c1_112 = arith.constant 1 : index
    %c4_113 = arith.constant 4 : index
    %c0_114 = arith.constant 0 : index
    %219 = vector.load %arg4[%c1_112, %c4_113, %c0_114] : memref<2x16x128xf32, #tpu.memory_space<vmem>>, vector<1x1x16xf32>
    %220 = vector.shape_cast %219 : vector<1x1x16xf32> to vector<1x16xf32>
    %221 = vector.broadcast %220 : vector<1x16xf32> to vector<16x16xf32>
    %222 = arith.addf %218, %221 : vector<16x16xf32>
    %223 = arith.truncf %208 : vector<16x16xf32> to vector<16x16xbf16>
    %224 = arith.truncf %215 : vector<16x16xf32> to vector<16x16xbf16>
    %cst_115 = arith.constant dense<0.000000e+00> : vector<16x16xf32>
    %225 = tpu.matmul %223, %224, %cst_115 {dimension_numbers = #tpu.dot_dimension_numbers<[1], [1], [0], [0], [0, 0, 1, 0], [], []>} : vector<16x16xbf16>, vector<16x16xbf16>, vector<16x16xf32> -> vector<16x16xf32>
    %cst_116 = arith.constant 2.500000e-01 : f32
    %226 = vector.broadcast %cst_116 : f32 to vector<16x16xf32>
    %227 = arith.mulf %225, %226 : vector<16x16xf32>
    %228 = arith.addf %227, %25 : vector<16x16xf32>
    %cst_117 = arith.constant dense<0xFF800000> : vector<16xf32>
    %229 = vector.multi_reduction <maximumf>, %228, %cst_117 [1] : vector<16x16xf32> to vector<16xf32>
    %230 = vector.shape_cast %229 : vector<16xf32> to vector<16x1xf32>
    %231 = vector.broadcast %230 : vector<16x1xf32> to vector<16x16xf32>
    %232 = arith.subf %228, %231 : vector<16x16xf32>
    %233 = math.exp %232 : vector<16x16xf32>
    %cst_118 = arith.constant dense<0.000000e+00> : vector<16xf32>
    %234 = vector.multi_reduction <add>, %233, %cst_118 [1] : vector<16x16xf32> to vector<16xf32>
    %235 = vector.shape_cast %234 : vector<16xf32> to vector<16x1xf32>
    %236 = tpu.reciprocal %235 {approx = true} : vector<16x1xf32> -> vector<16x1xf32>
    %237 = vector.broadcast %236 : vector<16x1xf32> to vector<16x16xf32>
    %238 = arith.mulf %233, %237 : vector<16x16xf32>
    %239 = arith.truncf %238 : vector<16x16xf32> to vector<16x16xbf16>
    %240 = arith.truncf %222 : vector<16x16xf32> to vector<16x16xbf16>
    %cst_119 = arith.constant dense<0.000000e+00> : vector<16x16xf32>
    %241 = tpu.matmul %239, %240, %cst_119 {dimension_numbers = #tpu.dot_dimension_numbers<[1], [0], [0], [1], [0, 0, 1, 1], [], []>} : vector<16x16xbf16>, vector<16x16xbf16>, vector<16x16xf32> -> vector<16x16xf32>
    %c1_120 = arith.constant 1 : index
    %c192_121 = arith.constant 192 : index
    %c0_122 = arith.constant 0 : index
    %242 = vector.load %arg3[%c1_120, %c192_121, %c0_122] : memref<2x320x128xbf16, #tpu.memory_space<vmem>>, vector<1x16x32xbf16>
    %243 = vector.shape_cast %242 : vector<1x16x32xbf16> to vector<16x32xbf16>
    %244 = arith.truncf %241 : vector<16x16xf32> to vector<16x16xbf16>
    %cst_123 = arith.constant dense<0.000000e+00> : vector<16x32xf32>
    %245 = tpu.matmul %244, %243, %cst_123 {dimension_numbers = #tpu.dot_dimension_numbers<[1], [0], [0], [1], [0, 0, 1, 1], [], []>} : vector<16x16xbf16>, vector<16x32xbf16>, vector<16x32xf32> -> vector<16x32xf32>
    %246 = arith.addf %201, %245 : vector<16x32xf32>
    %c1_124 = arith.constant 1 : index
    %c32_125 = arith.constant 32 : index
    %c0_126 = arith.constant 0 : index
    %247 = vector.load %arg3[%c1_124, %c32_125, %c0_126] : memref<2x320x128xbf16, #tpu.memory_space<vmem>>, vector<1x32x16xbf16>
    %248 = vector.shape_cast %247 : vector<1x32x16xbf16> to vector<32x16xbf16>
    %cst_127 = arith.constant dense<0.000000e+00> : vector<16x16xf32>
    %249 = tpu.matmul %200, %248, %cst_127 {dimension_numbers = #tpu.dot_dimension_numbers<[1], [0], [0], [1], [0, 0, 1, 1], [], []>} : vector<16x32xbf16>, vector<32x16xbf16>, vector<16x16xf32> -> vector<16x16xf32>
    %c1_128 = arith.constant 1 : index
    %c1_129 = arith.constant 1 : index
    %c0_130 = arith.constant 0 : index
    %250 = vector.load %arg4[%c1_128, %c1_129, %c0_130] : memref<2x16x128xf32, #tpu.memory_space<vmem>>, vector<1x1x16xf32>
    %251 = vector.shape_cast %250 : vector<1x1x16xf32> to vector<1x16xf32>
    %252 = vector.broadcast %251 : vector<1x16xf32> to vector<16x16xf32>
    %253 = arith.addf %249, %252 : vector<16x16xf32>
    %c1_131 = arith.constant 1 : index
    %c96_132 = arith.constant 96 : index
    %c0_133 = arith.constant 0 : index
    %254 = vector.load %arg3[%c1_131, %c96_132, %c0_133] : memref<2x320x128xbf16, #tpu.memory_space<vmem>>, vector<1x32x16xbf16>
    %255 = vector.shape_cast %254 : vector<1x32x16xbf16> to vector<32x16xbf16>
    %cst_134 = arith.constant dense<0.000000e+00> : vector<16x16xf32>
    %256 = tpu.matmul %200, %255, %cst_134 {dimension_numbers = #tpu.dot_dimension_numbers<[1], [0], [0], [1], [0, 0, 1, 1], [], []>} : vector<16x32xbf16>, vector<32x16xbf16>, vector<16x16xf32> -> vector<16x16xf32>
    %c1_135 = arith.constant 1 : index
    %c3_136 = arith.constant 3 : index
    %c0_137 = arith.constant 0 : index
    %257 = vector.load %arg4[%c1_135, %c3_136, %c0_137] : memref<2x16x128xf32, #tpu.memory_space<vmem>>, vector<1x1x16xf32>
    %258 = vector.shape_cast %257 : vector<1x1x16xf32> to vector<1x16xf32>
    %259 = vector.broadcast %258 : vector<1x16xf32> to vector<16x16xf32>
    %260 = arith.addf %256, %259 : vector<16x16xf32>
    %c1_138 = arith.constant 1 : index
    %c160_139 = arith.constant 160 : index
    %c0_140 = arith.constant 0 : index
    %261 = vector.load %arg3[%c1_138, %c160_139, %c0_140] : memref<2x320x128xbf16, #tpu.memory_space<vmem>>, vector<1x32x16xbf16>
    %262 = vector.shape_cast %261 : vector<1x32x16xbf16> to vector<32x16xbf16>
    %cst_141 = arith.constant dense<0.000000e+00> : vector<16x16xf32>
    %263 = tpu.matmul %200, %262, %cst_141 {dimension_numbers = #tpu.dot_dimension_numbers<[1], [0], [0], [1], [0, 0, 1, 1], [], []>} : vector<16x32xbf16>, vector<32x16xbf16>, vector<16x16xf32> -> vector<16x16xf32>
    %c1_142 = arith.constant 1 : index
    %c5_143 = arith.constant 5 : index
    %c0_144 = arith.constant 0 : index
    %264 = vector.load %arg4[%c1_142, %c5_143, %c0_144] : memref<2x16x128xf32, #tpu.memory_space<vmem>>, vector<1x1x16xf32>
    %265 = vector.shape_cast %264 : vector<1x1x16xf32> to vector<1x16xf32>
    %266 = vector.broadcast %265 : vector<1x16xf32> to vector<16x16xf32>
    %267 = arith.addf %263, %266 : vector<16x16xf32>
    %268 = arith.truncf %253 : vector<16x16xf32> to vector<16x16xbf16>
    %269 = arith.truncf %260 : vector<16x16xf32> to vector<16x16xbf16>
    %cst_145 = arith.constant dense<0.000000e+00> : vector<16x16xf32>
    %270 = tpu.matmul %268, %269, %cst_145 {dimension_numbers = #tpu.dot_dimension_numbers<[1], [1], [0], [0], [0, 0, 1, 0], [], []>} : vector<16x16xbf16>, vector<16x16xbf16>, vector<16x16xf32> -> vector<16x16xf32>
    %cst_146 = arith.constant 2.500000e-01 : f32
    %271 = vector.broadcast %cst_146 : f32 to vector<16x16xf32>
    %272 = arith.mulf %270, %271 : vector<16x16xf32>
    %273 = arith.addf %272, %25 : vector<16x16xf32>
    %cst_147 = arith.constant dense<0xFF800000> : vector<16xf32>
    %274 = vector.multi_reduction <maximumf>, %273, %cst_147 [1] : vector<16x16xf32> to vector<16xf32>
    %275 = vector.shape_cast %274 : vector<16xf32> to vector<16x1xf32>
    %276 = vector.broadcast %275 : vector<16x1xf32> to vector<16x16xf32>
    %277 = arith.subf %273, %276 : vector<16x16xf32>
    %278 = math.exp %277 : vector<16x16xf32>
    %cst_148 = arith.constant dense<0.000000e+00> : vector<16xf32>
    %279 = vector.multi_reduction <add>, %278, %cst_148 [1] : vector<16x16xf32> to vector<16xf32>
    %280 = vector.shape_cast %279 : vector<16xf32> to vector<16x1xf32>
    %281 = tpu.reciprocal %280 {approx = true} : vector<16x1xf32> -> vector<16x1xf32>
    %282 = vector.broadcast %281 : vector<16x1xf32> to vector<16x16xf32>
    %283 = arith.mulf %278, %282 : vector<16x16xf32>
    %284 = arith.truncf %283 : vector<16x16xf32> to vector<16x16xbf16>
    %285 = arith.truncf %267 : vector<16x16xf32> to vector<16x16xbf16>
    %cst_149 = arith.constant dense<0.000000e+00> : vector<16x16xf32>
    %286 = tpu.matmul %284, %285, %cst_149 {dimension_numbers = #tpu.dot_dimension_numbers<[1], [0], [0], [1], [0, 0, 1, 1], [], []>} : vector<16x16xbf16>, vector<16x16xbf16>, vector<16x16xf32> -> vector<16x16xf32>
    %c1_150 = arith.constant 1 : index
    %c208_151 = arith.constant 208 : index
    %c0_152 = arith.constant 0 : index
    %287 = vector.load %arg3[%c1_150, %c208_151, %c0_152] : memref<2x320x128xbf16, #tpu.memory_space<vmem>>, vector<1x16x32xbf16>
    %288 = vector.shape_cast %287 : vector<1x16x32xbf16> to vector<16x32xbf16>
    %289 = arith.truncf %286 : vector<16x16xf32> to vector<16x16xbf16>
    %cst_153 = arith.constant dense<0.000000e+00> : vector<16x32xf32>
    %290 = tpu.matmul %289, %288, %cst_153 {dimension_numbers = #tpu.dot_dimension_numbers<[1], [0], [0], [1], [0, 0, 1, 1], [], []>} : vector<16x16xbf16>, vector<16x32xbf16>, vector<16x32xf32> -> vector<16x32xf32>
    %291 = arith.addf %246, %290 : vector<16x32xf32>
    %c1_154 = arith.constant 1 : index
    %c6_155 = arith.constant 6 : index
    %c0_156 = arith.constant 0 : index
    %292 = vector.load %arg4[%c1_154, %c6_155, %c0_156] : memref<2x16x128xf32, #tpu.memory_space<vmem>>, vector<1x1x32xf32>
    %293 = vector.shape_cast %292 : vector<1x1x32xf32> to vector<1x32xf32>
    %294 = vector.broadcast %293 : vector<1x32xf32> to vector<16x32xf32>
    %295 = arith.addf %291, %294 : vector<16x32xf32>
    %296 = arith.addf %295, %199 : vector<16x32xf32>
    %c1_157 = arith.constant 1 : index
    %c7_158 = arith.constant 7 : index
    %c0_159 = arith.constant 0 : index
    %297 = vector.load %arg4[%c1_157, %c7_158, %c0_159] : memref<2x16x128xf32, #tpu.memory_space<vmem>>, vector<1x1x32xf32>
    %298 = vector.shape_cast %297 : vector<1x1x32xf32> to vector<1x32xf32>
    %c1_160 = arith.constant 1 : index
    %c8_161 = arith.constant 8 : index
    %c0_162 = arith.constant 0 : index
    %299 = vector.load %arg4[%c1_160, %c8_161, %c0_162] : memref<2x16x128xf32, #tpu.memory_space<vmem>>, vector<1x1x32xf32>
    %300 = vector.shape_cast %299 : vector<1x1x32xf32> to vector<1x32xf32>
    %cst_163 = arith.constant dense<0.000000e+00> : vector<16xf32>
    %301 = vector.multi_reduction <add>, %296, %cst_163 [1] : vector<16x32xf32> to vector<16xf32>
    %302 = vector.shape_cast %301 : vector<16xf32> to vector<16x1xf32>
    %cst_164 = arith.constant 3.200000e+01 : f32
    %303 = vector.broadcast %cst_164 : f32 to vector<16x1xf32>
    %304 = arith.divf %302, %303 : vector<16x1xf32>
    %305 = vector.broadcast %304 : vector<16x1xf32> to vector<16x32xf32>
    %306 = arith.subf %296, %305 : vector<16x32xf32>
    %307 = arith.mulf %306, %306 : vector<16x32xf32>
    %cst_165 = arith.constant dense<0.000000e+00> : vector<16xf32>
    %308 = vector.multi_reduction <add>, %307, %cst_165 [1] : vector<16x32xf32> to vector<16xf32>
    %309 = vector.shape_cast %308 : vector<16xf32> to vector<16x1xf32>
    %cst_166 = arith.constant 3.200000e+01 : f32
    %310 = vector.broadcast %cst_166 : f32 to vector<16x1xf32>
    %311 = arith.divf %309, %310 : vector<16x1xf32>
    %312 = vector.broadcast %304 : vector<16x1xf32> to vector<16x32xf32>
    %313 = arith.subf %296, %312 : vector<16x32xf32>
    %cst_167 = arith.constant 9.99999996E-13 : f32
    %314 = vector.broadcast %cst_167 : f32 to vector<16x1xf32>
    %315 = arith.addf %311, %314 : vector<16x1xf32>
    %316 = math.rsqrt %315 : vector<16x1xf32>
    %317 = vector.broadcast %316 : vector<16x1xf32> to vector<16x32xf32>
    %318 = arith.mulf %313, %317 : vector<16x32xf32>
    %319 = vector.broadcast %298 : vector<1x32xf32> to vector<16x32xf32>
    %320 = arith.mulf %318, %319 : vector<16x32xf32>
    %321 = vector.broadcast %300 : vector<1x32xf32> to vector<16x32xf32>
    %322 = arith.addf %320, %321 : vector<16x32xf32>
    %c1_168 = arith.constant 1 : index
    %c224_169 = arith.constant 224 : index
    %c0_170 = arith.constant 0 : index
    %323 = vector.load %arg3[%c1_168, %c224_169, %c0_170] : memref<2x320x128xbf16, #tpu.memory_space<vmem>>, vector<1x32x64xbf16>
    %324 = vector.shape_cast %323 : vector<1x32x64xbf16> to vector<32x64xbf16>
    %325 = arith.truncf %322 : vector<16x32xf32> to vector<16x32xbf16>
    %cst_171 = arith.constant dense<0.000000e+00> : vector<16x64xf32>
    %326 = tpu.matmul %325, %324, %cst_171 {dimension_numbers = #tpu.dot_dimension_numbers<[1], [0], [0], [1], [0, 0, 1, 1], [], []>} : vector<16x32xbf16>, vector<32x64xbf16>, vector<16x64xf32> -> vector<16x64xf32>
    %c1_172 = arith.constant 1 : index
    %c9_173 = arith.constant 9 : index
    %c0_174 = arith.constant 0 : index
    %327 = vector.load %arg4[%c1_172, %c9_173, %c0_174] : memref<2x16x128xf32, #tpu.memory_space<vmem>>, vector<1x1x64xf32>
    %328 = vector.shape_cast %327 : vector<1x1x64xf32> to vector<1x64xf32>
    %329 = vector.broadcast %328 : vector<1x64xf32> to vector<16x64xf32>
    %330 = arith.addf %326, %329 : vector<16x64xf32>
    %cst_175 = arith.constant 5.000000e-01 : f32
    %331 = vector.broadcast %cst_175 : f32 to vector<16x64xf32>
    %332 = arith.mulf %331, %330 : vector<16x64xf32>
    %cst_176 = arith.constant 0.707106769 : f32
    %333 = vector.broadcast %cst_176 : f32 to vector<16x64xf32>
    %334 = arith.mulf %330, %333 : vector<16x64xf32>
    %335 = math.erf %334 : vector<16x64xf32>
    %cst_177 = arith.constant 1.000000e+00 : f32
    %336 = vector.broadcast %cst_177 : f32 to vector<16x64xf32>
    %337 = arith.addf %336, %335 : vector<16x64xf32>
    %338 = arith.mulf %332, %337 : vector<16x64xf32>
    %c1_178 = arith.constant 1 : index
    %c256_179 = arith.constant 256 : index
    %c0_180 = arith.constant 0 : index
    %339 = vector.load %arg3[%c1_178, %c256_179, %c0_180] : memref<2x320x128xbf16, #tpu.memory_space<vmem>>, vector<1x64x32xbf16>
    %340 = vector.shape_cast %339 : vector<1x64x32xbf16> to vector<64x32xbf16>
    %341 = arith.truncf %338 : vector<16x64xf32> to vector<16x64xbf16>
    %cst_181 = arith.constant dense<0.000000e+00> : vector<16x32xf32>
    %342 = tpu.matmul %341, %340, %cst_181 {dimension_numbers = #tpu.dot_dimension_numbers<[1], [0], [0], [1], [0, 0, 1, 1], [], []>} : vector<16x64xbf16>, vector<64x32xbf16>, vector<16x32xf32> -> vector<16x32xf32>
    %c1_182 = arith.constant 1 : index
    %c10_183 = arith.constant 10 : index
    %c0_184 = arith.constant 0 : index
    %343 = vector.load %arg4[%c1_182, %c10_183, %c0_184] : memref<2x16x128xf32, #tpu.memory_space<vmem>>, vector<1x1x32xf32>
    %344 = vector.shape_cast %343 : vector<1x1x32xf32> to vector<1x32xf32>
    %345 = vector.broadcast %344 : vector<1x32xf32> to vector<16x32xf32>
    %346 = arith.addf %342, %345 : vector<16x32xf32>
    %347 = arith.addf %346, %322 : vector<16x32xf32>
    %c1_185 = arith.constant 1 : index
    %c11_186 = arith.constant 11 : index
    %c0_187 = arith.constant 0 : index
    %348 = vector.load %arg4[%c1_185, %c11_186, %c0_187] : memref<2x16x128xf32, #tpu.memory_space<vmem>>, vector<1x1x32xf32>
    %349 = vector.shape_cast %348 : vector<1x1x32xf32> to vector<1x32xf32>
    %c1_188 = arith.constant 1 : index
    %c12_189 = arith.constant 12 : index
    %c0_190 = arith.constant 0 : index
    %350 = vector.load %arg4[%c1_188, %c12_189, %c0_190] : memref<2x16x128xf32, #tpu.memory_space<vmem>>, vector<1x1x32xf32>
    %351 = vector.shape_cast %350 : vector<1x1x32xf32> to vector<1x32xf32>
    %cst_191 = arith.constant dense<0.000000e+00> : vector<16xf32>
    %352 = vector.multi_reduction <add>, %347, %cst_191 [1] : vector<16x32xf32> to vector<16xf32>
    %353 = vector.shape_cast %352 : vector<16xf32> to vector<16x1xf32>
    %cst_192 = arith.constant 3.200000e+01 : f32
    %354 = vector.broadcast %cst_192 : f32 to vector<16x1xf32>
    %355 = arith.divf %353, %354 : vector<16x1xf32>
    %356 = vector.broadcast %355 : vector<16x1xf32> to vector<16x32xf32>
    %357 = arith.subf %347, %356 : vector<16x32xf32>
    %358 = arith.mulf %357, %357 : vector<16x32xf32>
    %cst_193 = arith.constant dense<0.000000e+00> : vector<16xf32>
    %359 = vector.multi_reduction <add>, %358, %cst_193 [1] : vector<16x32xf32> to vector<16xf32>
    %360 = vector.shape_cast %359 : vector<16xf32> to vector<16x1xf32>
    %cst_194 = arith.constant 3.200000e+01 : f32
    %361 = vector.broadcast %cst_194 : f32 to vector<16x1xf32>
    %362 = arith.divf %360, %361 : vector<16x1xf32>
    %363 = vector.broadcast %355 : vector<16x1xf32> to vector<16x32xf32>
    %364 = arith.subf %347, %363 : vector<16x32xf32>
    %cst_195 = arith.constant 9.99999996E-13 : f32
    %365 = vector.broadcast %cst_195 : f32 to vector<16x1xf32>
    %366 = arith.addf %362, %365 : vector<16x1xf32>
    %367 = math.rsqrt %366 : vector<16x1xf32>
    %368 = vector.broadcast %367 : vector<16x1xf32> to vector<16x32xf32>
    %369 = arith.mulf %364, %368 : vector<16x32xf32>
    %370 = vector.broadcast %349 : vector<1x32xf32> to vector<16x32xf32>
    %371 = arith.mulf %369, %370 : vector<16x32xf32>
    %372 = vector.broadcast %351 : vector<1x32xf32> to vector<16x32xf32>
    %373 = arith.addf %371, %372 : vector<16x32xf32>
    %374 = vector.extract_strided_slice %373 {offsets = [0, 0], sizes = [1, 32], strides = [1, 1]} : vector<16x32xf32> to vector<1x32xf32>
    %375 = vector.extract_strided_slice %373 {offsets = [8, 0], sizes = [1, 32], strides = [1, 1]} : vector<16x32xf32> to vector<1x32xf32>
    %376 = tpu.concatenate %374, %375 in 0 : vector<1x32xf32>, vector<1x32xf32> -> vector<2x32xf32>
    %c0_196 = arith.constant 0 : index
    %c0_197 = arith.constant 0 : index
    %377 = vector.load %arg5[%c0_196, %c0_197] : memref<64x128xbf16, #tpu.memory_space<vmem>>, vector<32x32xbf16>
    %378 = arith.truncf %376 : vector<2x32xf32> to vector<2x32xbf16>
    %cst_198 = arith.constant dense<0.000000e+00> : vector<2x32xf32>
    %379 = tpu.matmul %378, %377, %cst_198 {dimension_numbers = #tpu.dot_dimension_numbers<[1], [0], [0], [1], [0, 0, 1, 1], [], []>} : vector<2x32xbf16>, vector<32x32xbf16>, vector<2x32xf32> -> vector<2x32xf32>
    %c2_199 = arith.constant 2 : index
    %c0_200 = arith.constant 0 : index
    %380 = vector.load %arg6[%c2_199, %c0_200] : memref<8x128xf32, #tpu.memory_space<vmem>>, vector<1x32xf32>
    %381 = vector.broadcast %380 : vector<1x32xf32> to vector<2x32xf32>
    %382 = arith.addf %379, %381 : vector<2x32xf32>
    %383 = math.tanh %382 : vector<2x32xf32>
    %c32_201 = arith.constant 32 : index
    %c0_202 = arith.constant 0 : index
    %384 = vector.load %arg5[%c32_201, %c0_202] : memref<64x128xbf16, #tpu.memory_space<vmem>>, vector<32x128xbf16>
    %385 = arith.truncf %383 : vector<2x32xf32> to vector<2x32xbf16>
    %cst_203 = arith.constant dense<0.000000e+00> : vector<2x128xf32>
    %386 = tpu.matmul %385, %384, %cst_203 {dimension_numbers = #tpu.dot_dimension_numbers<[1], [0], [0], [1], [0, 0, 1, 1], [], []>} : vector<2x32xbf16>, vector<32x128xbf16>, vector<2x128xf32> -> vector<2x128xf32>
    %c3_204 = arith.constant 3 : index
    %c0_205 = arith.constant 0 : index
    %387 = vector.load %arg6[%c3_204, %c0_205] : memref<8x128xf32, #tpu.memory_space<vmem>>, vector<1x128xf32>
    %388 = vector.broadcast %387 : vector<1x128xf32> to vector<2x128xf32>
    %389 = arith.addf %386, %388 : vector<2x128xf32>
    %c0_206 = arith.constant 0 : index
    %c0_207 = arith.constant 0 : index
    %390 = vector.load %arg7[%c0_206, %c0_207] : memref<2x128xf32, #tpu.memory_space<vmem>>, vector<2x128xf32>
    tpu.vector_store %arg7[%c0_206, %c0_207], %389 {strides = array<i32>} : memref<2x128xf32, #tpu.memory_space<vmem>>, vector<2x128xf32>,
    return
  }
  func.func @transform_0(%arg0: i32) -> (i32, i32) {
    %c0_i32 = arith.constant 0 : i32
    %c0_i32_0 = arith.constant 0 : i32
    %c0_i32_1 = arith.constant 0 : i32
    return %c0_i32, %c0_i32_0 : i32, i32
  }
  func.func @transform_1(%arg0: i32) -> (i32, i32) {
    %c0_i32 = arith.constant 0 : i32
    %c0_i32_0 = arith.constant 0 : i32
    %c0_i32_1 = arith.constant 0 : i32
    return %c0_i32, %c0_i32_0 : i32, i32
  }
  func.func @transform_2(%arg0: i32) -> (i32, i32, i32) {
    %c0_i32 = arith.constant 0 : i32
    %c0_i32_0 = arith.constant 0 : i32
    %c0_i32_1 = arith.constant 0 : i32
    %c0_i32_2 = arith.constant 0 : i32
    return %c0_i32, %c0_i32_0, %c0_i32_1 : i32, i32, i32
  }
  func.func @transform_3(%arg0: i32) -> (i32, i32, i32) {
    %c0_i32 = arith.constant 0 : i32
    %c0_i32_0 = arith.constant 0 : i32
    %c0_i32_1 = arith.constant 0 : i32
    %c0_i32_2 = arith.constant 0 : i32
    return %c0_i32, %c0_i32_0, %c0_i32_1 : i32, i32, i32
  }
  func.func @transform_4(%arg0: i32) -> (i32, i32) {
    %c0_i32 = arith.constant 0 : i32
    %c0_i32_0 = arith.constant 0 : i32
    %c0_i32_1 = arith.constant 0 : i32
    return %c0_i32, %c0_i32_0 : i32, i32
  }
  func.func @transform_5(%arg0: i32) -> (i32, i32) {
    %c0_i32 = arith.constant 0 : i32
    %c0_i32_0 = arith.constant 0 : i32
    %c0_i32_1 = arith.constant 0 : i32
    return %c0_i32, %c0_i32_0 : i32, i32
  }
  func.func @transform_6(%arg0: i32) -> (i32, i32) {
    %c0_i32 = arith.constant 0 : i32
    %c0_i32_0 = arith.constant 0 : i32
    %c0_i32_1 = arith.constant 0 : i32
    return %c0_i32, %c0_i32_0 : i32, i32
  }
}

</mosaic_0001>

<llo_original>
// kernel: bert_classifier_forward.1
$region0: #{bert_classifier_forward.1}
  #allocation0 [shape = 'u32[]', space=smem, size = 0x4, offset = 0x4, fixed_abs, tag = 'smem constant byte address 0x4 - core index']
  #allocation1 [shape = 'u32[144,128]{1,0:T(1,128)}', space=vmem, size = 0x12000, scoped, tag = 'internal scratch']
  %s0 = inlined_call_operand.vmem [shape: f32[16,32], index: 0, kind: input, shape index: {}]
  %s1 = inlined_call_operand.vmem [shape: f32[16,16], index: 1, kind: input, shape index: {}]
  %s2 = inlined_call_operand.vmem [shape: bf16[2,320,128], index: 2, kind: input, shape index: {}]
  %s3 = inlined_call_operand.vmem [shape: f32[2,16,128], index: 3, kind: input, shape index: {}]
  %s4 = inlined_call_operand.vmem [shape: bf16[64,128], index: 4, kind: input, shape index: {}]
  %s5 = inlined_call_operand.vmem [shape: f32[8,128], index: 5, kind: input, shape index: {}]
  %s6 = inlined_call_operand.hbm [shape: f32[2,128], index: 6, kind: output, shape index: {}]
  %s7 = sld [smem:[#allocation0]]
  $region34: #{bert_classifier_forward.1} parent=0
    _
  %s9 = ssub.s32 1, %s7
  %s10 = scalar_select 0, %s9, %s7
  $region1: #{bert_classifier_forward.1} parent=0
    #allocation2 [shape = 'u8[1024]{0}', space=vmem, size = 0x400, scoped, tag = 'output window, operand 0, single buffered']
    #allocation3 [shape = 's32[1]{0}', space=sflag, size = 0x4, scoped, tag = 'scoped memory for bert_classifier_forward.1']
    %11 = vsyncpa [#allocation3], 0
    // Predicated region
    $region2: #{bert_classifier_forward.1} parent=1 // pred_check
      _
    $region3: #{bert_classifier_forward.1} parent=1 // pred_check_branch
      %13 = sbr.rel (0) target = $region5
    $region4: #{bert_classifier_forward.1} parent=1 // pred_region
      _
    $region5: #{bert_classifier_forward.1} parent=1 // pred_fallthru
      _
    // Predicated region
    $region6: #{bert_classifier_forward.1} parent=1 // pred_check
      _
    $region7: #{bert_classifier_forward.1} parent=1 // pred_check_branch
      %15 = sbr.rel (0) target = $region9
    $region8: #{bert_classifier_forward.1} parent=1 // pred_region
      _
    $region9: #{bert_classifier_forward.1} parent=1 // pred_fallthru
      _
    // Predicated region
    $region10: #{bert_classifier_forward.1} parent=1 // pred_check
      _
    $region11: #{bert_classifier_forward.1} parent=1 // pred_check_branch
      %17 = sbr.rel (0) target = $region13
    $region12: #{bert_classifier_forward.1} parent=1 // pred_region
      _
    $region13: #{bert_classifier_forward.1} parent=1 // pred_fallthru
      _
    // Predicated region
    $region14: #{bert_classifier_forward.1} parent=1 // pred_check
      _
    $region15: #{bert_classifier_forward.1} parent=1 // pred_check_branch
      %19 = sbr.rel (0) target = $region17
    $region16: #{bert_classifier_forward.1} parent=1 // pred_region
      _
    $region17: #{bert_classifier_forward.1} parent=1 // pred_fallthru
      _
    // Predicated region
    $region18: #{bert_classifier_forward.1} parent=1 // pred_check
      _
    $region19: #{bert_classifier_forward.1} parent=1 // pred_check_branch
      %21 = sbr.rel (0) target = $region21
    $region20: #{bert_classifier_forward.1} parent=1 // pred_region
      _
    $region21: #{bert_classifier_forward.1} parent=1 // pred_fallthru
      _
    // Predicated region
    $region22: #{bert_classifier_forward.1} parent=1 // pred_check
      _
    $region23: #{bert_classifier_forward.1} parent=1 // pred_check_branch
      %23 = sbr.rel (0) target = $region25
    $region24: #{bert_classifier_forward.1} parent=1 // pred_region
      _
    $region25: #{bert_classifier_forward.1} parent=1 // pred_fallthru
      _
    %v25 = vld [vmem:[%s0] sm:$0xff]
    %v26 = vld [vmem:[%s0 + $0x8] sm:$0xff]
    %v27 = vld [vmem:[%s5] sm:$0x1]
    %v28 = vld [vmem:[%s5 + $0x1] sm:$0x1]
    %vm29 = vcmask 261120
    %v30 = vsel %vm29, %v25, 0.0
    %31 = vadd.xlane.f32.xlu0 %v30
    %v32 = vpop.xlane.xlu0 %31
    %v33 = vsel %vm29, %v26, 0.0
    %34 = vadd.xlane.f32.xlu0 %v33
    %v35 = vpop.xlane.xlu0 %34
    %v36 = vrcp.pop 32.0
    %v37 = vmul.f32 %v32, %v36
    %v38 = vmul.f32 %v35, %v36
    %v39 = vsub.f32 %v25, %v37
    %v40 = vsub.f32 %v26, %v38
    %v41 = vmul.f32 %v39, %v39
    %v42 = vmul.f32 %v40, %v40
    %v43 = vsel %vm29, %v41, 0.0
    %44 = vadd.xlane.f32.xlu0 %v43
    %v45 = vpop.xlane.xlu0 %44
    %v46 = vsel %vm29, %v42, 0.0
    %47 = vadd.xlane.f32.xlu0 %v46
    %v48 = vpop.xlane.xlu0 %47
    %v49 = vmul.f32 %v45, %v36
    %v50 = vmul.f32 %v48, %v36
    %v51 = vadd.f32 %v49, 1e-12
    %v52 = vadd.f32 %v50, 1e-12
    %v53 = vrsqrt.pop %v51
    %v54 = vrsqrt.pop %v52
    %v55 = vmul.f32 %v39, %v53
    %v56 = vmul.f32 %v40, %v54
    %v57 = vlaneseq
    %v58 = vshrl.u32 %v57, 7
    %v59 = vsub.s32 0, %v58
    %v60 = vrot.slane %v27, %v59
    %v61 = vmul.f32 %v55, %v60
    %v62 = vmul.f32 %v56, %v60
    %v63 = vlaneseq
    %v64 = vshrl.u32 %v63, 7
    %v65 = vsub.s32 0, %v64
    %v66 = vrot.slane %v28, %v65
    %v67 = vadd.f32 %v61, %v66
    %v68 = vadd.f32 %v62, %v66
    %v69 = vld [vmem:[%s1] sm:$0xff]
    %v70 = vld [vmem:[%s1 + $0x8] sm:$0xff]
    %v71 = vpack.c.bf16 %v68, %v67
    %v72 = vld [vmem:[%s2] sm:$0xf]
    %v73 = vld [vmem:[%s2 + $0x4] sm:$0xf]
    %v74 = vld [vmem:[%s2 + $0x8] sm:$0xf]
    %v75 = vld [vmem:[%s2 + $0xc] sm:$0xf]
    %v76 = vld [vmem:[%s3] sm:$0x1]
    %v77 = vlaneseq
    %v78 = vshrl.u32 %v77, 7
    %v79 = vsub.s32 0, %v78
    %v80 = vrot.slane %v76, %v79
    %v85 = vunpack.c.l.b16 %v72
    %v86 = vunpack.c.l.b16 %v73
    %v87 = vunpack.c.l.b16 %v74
    %v88 = vunpack.c.l.b16 %v75
    %v89 = vpack.c.b16 %v86, %v85
    %v90 = vpack.c.b16 %v88, %v87
    %v94 = vsel %vm29, %v71, 0
    %96 = vmatprep.subr.bf16.mxu0 0
    %97 = vmatpush1.bf16.msra.mxu0 %v89
    %98 = vmatprep.subr.bf16.mxu0 0
    %99 = vmatpush1.bf16.msra.mxu0 %v90
    %100 = vmatprep.subr.bf16.mxu0 0
    %101 = vmatpush1.bf16.msra.mxu0 0
    %102 = vmatprep.subr.bf16.mxu0 0
    %103 = vmatpush1.bf16.msra.mxu0 0
    %104 = vmatprep.subr.bf16.mxu0 0
    %105 = vmatpush1.bf16.msra.mxu0 0
    %106 = vmatprep.subr.bf16.mxu0 0
    %107 = vmatpush1.bf16.msra.mxu0 0
    %108 = vmatprep.subr.bf16.mxu0 0
    %109 = vmatpush1.bf16.msra.mxu0 0
    %110 = vmatprep.subr.bf16.mxu0 0
    %111 = vmatpush1.bf16.msra.mxu0 0
    %112 = vmatprep.subr.bf16.mxu0 0
    %113 = vmatpush1.bf16.msra.mxu0 0
    %114 = vmatprep.subr.bf16.mxu0 0
    %115 = vmatpush1.bf16.msra.mxu0 0
    %116 = vmatprep.subr.bf16.mxu0 0
    %117 = vmatpush1.bf16.msra.mxu0 0
    %118 = vmatprep.subr.bf16.mxu0 0
    %119 = vmatpush1.bf16.msra.mxu0 0
    %120 = vmatprep.subr.bf16.mxu0 0
    %121 = vmatpush1.bf16.msra.mxu0 0
    %122 = vmatprep.subr.bf16.mxu0 0
    %123 = vmatpush1.bf16.msra.mxu0 0
    %124 = vmatprep.subr.bf16.mxu0 0
    %125 = vmatpush1.bf16.msra.mxu0 0
    %126 = vmatprep.subr.bf16.mxu0 0
    %127 = vmatpush1.bf16.msra.mxu0 0
    %128 = vmatprep.mubr.bf16.mxu0 0
    %129 = vmatmul.mubr.bf16.gmra.mrb[0].mxu0 %v94
    %v130 = vpop.f32.mrb[0].mxu0
    %v131 = vadd.f32 %v80, %v130
    %v132 = vpop.f32.mrb[0].mxu0
    %v133 = vpop.f32.mrb[0].mxu0
    %v134 = vadd.f32 %v80, %v133
    %v135 = vpop.f32.mrb[0].mxu0
    %136 = vdwg.mxu0
    %v137 = vld [vmem:[%s2 + $0x20] sm:$0xf]
    %v138 = vld [vmem:[%s2 + $0x24] sm:$0xf]
    %v139 = vld [vmem:[%s2 + $0x28] sm:$0xf]
    %v140 = vld [vmem:[%s2 + $0x2c] sm:$0xf]
    %v141 = vld [vmem:[%s3 + $0x2] sm:$0x1]
    %v142 = vlaneseq
    %v143 = vshrl.u32 %v142, 7
    %v144 = vsub.s32 0, %v143
    %v145 = vrot.slane %v141, %v144
    %v150 = vunpack.c.l.b16 %v137
    %v151 = vunpack.c.l.b16 %v138
    %v152 = vunpack.c.l.b16 %v139
    %v153 = vunpack.c.l.b16 %v140
    %v154 = vpack.c.b16 %v151, %v150
    %v155 = vpack.c.b16 %v153, %v152
    %158 = vmatprep.subr.bf16.mxu0 0
    %159 = vmatpush1.bf16.msra.mxu0 %v154
    %160 = vmatprep.subr.bf16.mxu0 0
    %161 = vmatpush1.bf16.msra.mxu0 %v155
    %162 = vmatprep.subr.bf16.mxu0 0
    %163 = vmatpush1.bf16.msra.mxu0 0
    %164 = vmatprep.subr.bf16.mxu0 0
    %165 = vmatpush1.bf16.msra.mxu0 0
    %166 = vmatprep.subr.bf16.mxu0 0
    %167 = vmatpush1.bf16.msra.mxu0 0
    %168 = vmatprep.subr.bf16.mxu0 0
    %169 = vmatpush1.bf16.msra.mxu0 0
    %170 = vmatprep.subr.bf16.mxu0 0
    %171 = vmatpush1.bf16.msra.mxu0 0
    %172 = vmatprep.subr.bf16.mxu0 0
    %173 = vmatpush1.bf16.msra.mxu0 0
    %174 = vmatprep.subr.bf16.mxu0 0
    %175 = vmatpush1.bf16.msra.mxu0 0
    %176 = vmatprep.subr.bf16.mxu0 0
    %177 = vmatpush1.bf16.msra.mxu0 0
    %178 = vmatprep.subr.bf16.mxu0 0
    %179 = vmatpush1.bf16.msra.mxu0 0
    %180 = vmatprep.subr.bf16.mxu0 0
    %181 = vmatpush1.bf16.msra.mxu0 0
    %182 = vmatprep.subr.bf16.mxu0 0
    %183 = vmatpush1.bf16.msra.mxu0 0
    %184 = vmatprep.subr.bf16.mxu0 0
    %185 = vmatpush1.bf16.msra.mxu0 0
    %186 = vmatprep.subr.bf16.mxu0 0
    %187 = vmatpush1.bf16.msra.mxu0 0
    %188 = vmatprep.subr.bf16.mxu0 0
    %189 = vmatpush1.bf16.msra.mxu0 0
    %190 = vmatprep.mubr.bf16.mxu0 0
    %191 = vmatmul.mubr.bf16.gmra.mrb[0].mxu0 %v94
    %v192 = vpop.f32.mrb[0].mxu0
    %v193 = vadd.f32 %v145, %v192
    %v194 = vpop.f32.mrb[0].mxu0
    %v195 = vpop.f32.mrb[0].mxu0
    %v196 = vadd.f32 %v145, %v195
    %v197 = vpop.f32.mrb[0].mxu0
    %198 = vdwg.mxu0
    %v199 = vld [vmem:[%s2 + $0x40] sm:$0xf]
    %v200 = vld [vmem:[%s2 + $0x44] sm:$0xf]
    %v201 = vld [vmem:[%s2 + $0x48] sm:$0xf]
    %v202 = vld [vmem:[%s2 + $0x4c] sm:$0xf]
    %v203 = vld [vmem:[%s3 + $0x4] sm:$0x1]
    %v204 = vlaneseq
    %v205 = vshrl.u32 %v204, 7
    %v206 = vsub.s32 0, %v205
    %v207 = vrot.slane %v203, %v206
    %v212 = vunpack.c.l.b16 %v199
    %v213 = vunpack.c.l.b16 %v200
    %v214 = vunpack.c.l.b16 %v201
    %v215 = vunpack.c.l.b16 %v202
    %v216 = vpack.c.b16 %v213, %v212
    %v217 = vpack.c.b16 %v215, %v214
    %220 = vmatprep.subr.bf16.mxu0 0
    %221 = vmatpush1.bf16.msra.mxu0 %v216
    %222 = vmatprep.subr.bf16.mxu0 0
    %223 = vmatpush1.bf16.msra.mxu0 %v217
    %224 = vmatprep.subr.bf16.mxu0 0
    %225 = vmatpush1.bf16.msra.mxu0 0
    %226 = vmatprep.subr.bf16.mxu0 0
    %227 = vmatpush1.bf16.msra.mxu0 0
    %228 = vmatprep.subr.bf16.mxu0 0
    %229 = vmatpush1.bf16.msra.mxu0 0
    %230 = vmatprep.subr.bf16.mxu0 0
    %231 = vmatpush1.bf16.msra.mxu0 0
    %232 = vmatprep.subr.bf16.mxu0 0
    %233 = vmatpush1.bf16.msra.mxu0 0
    %234 = vmatprep.subr.bf16.mxu0 0
    %235 = vmatpush1.bf16.msra.mxu0 0
    %236 = vmatprep.subr.bf16.mxu0 0
    %237 = vmatpush1.bf16.msra.mxu0 0
    %238 = vmatprep.subr.bf16.mxu0 0
    %239 = vmatpush1.bf16.msra.mxu0 0
    %240 = vmatprep.subr.bf16.mxu0 0
    %241 = vmatpush1.bf16.msra.mxu0 0
    %242 = vmatprep.subr.bf16.mxu0 0
    %243 = vmatpush1.bf16.msra.mxu0 0
    %244 = vmatprep.subr.bf16.mxu0 0
    %245 = vmatpush1.bf16.msra.mxu0 0
    %246 = vmatprep.subr.bf16.mxu0 0
    %247 = vmatpush1.bf16.msra.mxu0 0
    %248 = vmatprep.subr.bf16.mxu0 0
    %249 = vmatpush1.bf16.msra.mxu0 0
    %250 = vmatprep.subr.bf16.mxu0 0
    %251 = vmatpush1.bf16.msra.mxu0 0
    %252 = vmatprep.mubr.bf16.mxu0 0
    %253 = vmatmul.mubr.bf16.gmra.mrb[0].mxu0 %v94
    %v254 = vpop.f32.mrb[0].mxu0
    %v255 = vadd.f32 %v207, %v254
    %v256 = vpop.f32.mrb[0].mxu0
    %v257 = vpop.f32.mrb[0].mxu0
    %v258 = vadd.f32 %v207, %v257
    %v259 = vpop.f32.mrb[0].mxu0
    %260 = vdwg.mxu0
    %v261 = vpack.c.bf16 %v134, %v131
    %v262 = vpack.c.bf16 %v196, %v193
    %vm263 = vcmask 130048
    %v265 = vsel %vm263, %v261, 0
    %v268 = vsel %vm263, %v262, 0
    %270 = vmatprep.subr.bf16.mxu0 0
    %271 = vmatpush1.bf16.xpose.msra.mxu0 %v268
    %272 = vmatprep.subr.bf16.mxu0 0
    %273 = vmatpush1.bf16.xpose.msra.mxu0 0
    %274 = vmatprep.subr.bf16.mxu0 0
    %275 = vmatpush1.bf16.xpose.msra.mxu0 0
    %276 = vmatprep.subr.bf16.mxu0 0
    %277 = vmatpush1.bf16.xpose.msra.mxu0 0
    %278 = vmatprep.subr.bf16.mxu0 0
    %279 = vmatpush1.bf16.xpose.msra.mxu0 0
    %280 = vmatprep.subr.bf16.mxu0 0
    %281 = vmatpush1.bf16.xpose.msra.mxu0 0
    %282 = vmatprep.subr.bf16.mxu0 0
    %283 = vmatpush1.bf16.xpose.msra.mxu0 0
    %284 = vmatprep.subr.bf16.mxu0 0
    %285 = vmatpush1.bf16.xpose.msra.mxu0 0
    %286 = vmatprep.subr.bf16.mxu0 0
    %287 = vmatpush1.bf16.xpose.msra.mxu0 0
    %288 = vmatprep.subr.bf16.mxu0 0
    %289 = vmatpush1.bf16.xpose.msra.mxu0 0
    %290 = vmatprep.subr.bf16.mxu0 0
    %291 = vmatpush1.bf16.xpose.msra.mxu0 0
    %292 = vmatprep.subr.bf16.mxu0 0
    %293 = vmatpush1.bf16.xpose.msra.mxu0 0
    %294 = vmatprep.subr.bf16.mxu0 0
    %295 = vmatpush1.bf16.xpose.msra.mxu0 0
    %296 = vmatprep.subr.bf16.mxu0 0
    %297 = vmatpush1.bf16.xpose.msra.mxu0 0
    %298 = vmatprep.subr.bf16.mxu0 0
    %299 = vmatpush1.bf16.xpose.msra.mxu0 0
    %300 = vmatprep.subr.bf16.mxu0 0
    %301 = vmatpush1.bf16.xpose.msra.mxu0 0
    %302 = vmatprep.mubr.bf16.mxu0 0
    %303 = vmatmul.mubr.bf16.gmra.mrb[0].mxu0 %v265
    %v304 = vpop.f32.mrb[0].mxu0
    %v305 = vadd.f32 0.0, %v304
    %v306 = vpop.f32.mrb[0].mxu0
    %v307 = vpop.f32.mrb[0].mxu0
    %v308 = vadd.f32 0.0, %v307
    %v309 = vpop.f32.mrb[0].mxu0
    %310 = vdwg.mxu0
    %v311 = vmul.f32 %v305, 0.25
    %v312 = vmul.f32 %v308, 0.25
    %v313 = vadd.f32 %v311, %v69
    %v314 = vadd.f32 %v312, %v70
    %v315 = vsel %vm263, %v313, -inf
    %316 = vmax.xlane.f32.xlu0 %v315
    %v317 = vpop.xlane.xlu0 %316
    %v318 = vsel %vm263, %v314, -inf
    %319 = vmax.xlane.f32.xlu0 %v318
    %v320 = vpop.xlane.xlu0 %319
    %v321 = vsub.f32 %v313, %v317
    %v322 = vsub.f32 %v314, %v320
    %v323 = vmul.f32 %v321, 1.442695
    %v324 = vpow.pop %v323
    %v325 = vmul.f32 %v322, 1.442695
    %v326 = vpow.pop %v325
    %v327 = vsel %vm263, %v324, 0.0
    %328 = vadd.xlane.f32.xlu0 %v327
    %v329 = vpop.xlane.xlu0 %328
    %v330 = vsel %vm263, %v326, 0.0
    %331 = vadd.xlane.f32.xlu0 %v330
    %v332 = vpop.xlane.xlu0 %331
    %v333 = vrcp.pop %v329
    %v334 = vrcp.pop %v332
    %v335 = vmul.f32 %v324, %v333
    %v336 = vmul.f32 %v326, %v334
    %v337 = vpack.c.bf16 %v336, %v335
    %v338 = vpack.c.bf16 %v258, %v255
    %v340 = vsel %vm263, %v337, 0
    %342 = vmatprep.subr.bf16.mxu0 0
    %343 = vmatpush1.bf16.msra.mxu0 %v338
    %344 = vmatprep.subr.bf16.mxu0 0
    %345 = vmatpush1.bf16.msra.mxu0 0
    %346 = vmatprep.subr.bf16.mxu0 0
    %347 = vmatpush1.bf16.msra.mxu0 0
    %348 = vmatprep.subr.bf16.mxu0 0
    %349 = vmatpush1.bf16.msra.mxu0 0
    %350 = vmatprep.subr.bf16.mxu0 0
    %351 = vmatpush1.bf16.msra.mxu0 0
    %352 = vmatprep.subr.bf16.mxu0 0
    %353 = vmatpush1.bf16.msra.mxu0 0
    %354 = vmatprep.subr.bf16.mxu0 0
    %355 = vmatpush1.bf16.msra.mxu0 0
    %356 = vmatprep.subr.bf16.mxu0 0
    %357 = vmatpush1.bf16.msra.mxu0 0
    %358 = vmatprep.subr.bf16.mxu0 0
    %359 = vmatpush1.bf16.msra.mxu0 0
    %360 = vmatprep.subr.bf16.mxu0 0
    %361 = vmatpush1.bf16.msra.mxu0 0
    %362 = vmatprep.subr.bf16.mxu0 0
    %363 = vmatpush1.bf16.msra.mxu0 0
    %364 = vmatprep.subr.bf16.mxu0 0
    %365 = vmatpush1.bf16.msra.mxu0 0
    %366 = vmatprep.subr.bf16.mxu0 0
    %367 = vmatpush1.bf16.msra.mxu0 0
    %368 = vmatprep.subr.bf16.mxu0 0
    %369 = vmatpush1.bf16.msra.mxu0 0
    %370 = vmatprep.subr.bf16.mxu0 0
    %371 = vmatpush1.bf16.msra.mxu0 0
    %372 = vmatprep.subr.bf16.mxu0 0
    %373 = vmatpush1.bf16.msra.mxu0 0
    %374 = vmatprep.mubr.bf16.mxu0 0
    %375 = vmatmul.mubr.bf16.gmra.mrb[0].mxu0 %v340
    %v376 = vpop.f32.mrb[0].mxu0
    %v377 = vadd.f32 0.0, %v376
    %v378 = vpop.f32.mrb[0].mxu0
    %v379 = vpop.f32.mrb[0].mxu0
    %v380 = vadd.f32 0.0, %v379
    %v381 = vpop.f32.mrb[0].mxu0
    %382 = vdwg.mxu0
    %v383 = vld [vmem:[%s2 + $0x60] sm:$0xf]
    %v384 = vld [vmem:[%s2 + $0x64] sm:$0xf]
    %v385 = vpack.c.bf16 %v380, %v377
    %v386 = vld [vmem:[%s2 + $0x10] sm:$0xf]
    %v387 = vld [vmem:[%s2 + $0x14] sm:$0xf]
    %v388 = vld [vmem:[%s2 + $0x18] sm:$0xf]
    %v389 = vld [vmem:[%s2 + $0x1c] sm:$0xf]
    %v390 = vld [vmem:[%s3 + $0x1] sm:$0x1]
    %v391 = vlaneseq
    %v392 = vshrl.u32 %v391, 7
    %v393 = vsub.s32 0, %v392
    %v394 = vrot.slane %v390, %v393
    %v399 = vunpack.c.l.b16 %v386
    %v400 = vunpack.c.l.b16 %v387
    %v401 = vunpack.c.l.b16 %v388
    %v402 = vunpack.c.l.b16 %v389
    %v403 = vpack.c.b16 %v400, %v399
    %v404 = vpack.c.b16 %v402, %v401
    %407 = vmatprep.subr.bf16.mxu0 0
    %408 = vmatpush1.bf16.msra.mxu0 %v403
    %409 = vmatprep.subr.bf16.mxu0 0
    %410 = vmatpush1.bf16.msra.mxu0 %v404
    %411 = vmatprep.subr.bf16.mxu0 0
    %412 = vmatpush1.bf16.msra.mxu0 0
    %413 = vmatprep.subr.bf16.mxu0 0
    %414 = vmatpush1.bf16.msra.mxu0 0
    %415 = vmatprep.subr.bf16.mxu0 0
    %416 = vmatpush1.bf16.msra.mxu0 0
    %417 = vmatprep.subr.bf16.mxu0 0
    %418 = vmatpush1.bf16.msra.mxu0 0
    %419 = vmatprep.subr.bf16.mxu0 0
    %420 = vmatpush1.bf16.msra.mxu0 0
    %421 = vmatprep.subr.bf16.mxu0 0
    %422 = vmatpush1.bf16.msra.mxu0 0
    %423 = vmatprep.subr.bf16.mxu0 0
    %424 = vmatpush1.bf16.msra.mxu0 0
    %425 = vmatprep.subr.bf16.mxu0 0
    %426 = vmatpush1.bf16.msra.mxu0 0
    %427 = vmatprep.subr.bf16.mxu0 0
    %428 = vmatpush1.bf16.msra.mxu0 0
    %429 = vmatprep.subr.bf16.mxu0 0
    %430 = vmatpush1.bf16.msra.mxu0 0
    %431 = vmatprep.subr.bf16.mxu0 0
    %432 = vmatpush1.bf16.msra.mxu0 0
    %433 = vmatprep.subr.bf16.mxu0 0
    %434 = vmatpush1.bf16.msra.mxu0 0
    %435 = vmatprep.subr.bf16.mxu0 0
    %436 = vmatpush1.bf16.msra.mxu0 0
    %437 = vmatprep.subr.bf16.mxu0 0
    %438 = vmatpush1.bf16.msra.mxu0 0
    %439 = vmatprep.mubr.bf16.mxu0 0
    %440 = vmatmul.mubr.bf16.gmra.mrb[0].mxu0 %v94
    %v441 = vpop.f32.mrb[0].mxu0
    %v442 = vadd.f32 %v394, %v441
    %v443 = vpop.f32.mrb[0].mxu0
    %v444 = vpop.f32.mrb[0].mxu0
    %v445 = vadd.f32 %v394, %v444
    %v446 = vpop.f32.mrb[0].mxu0
    %447 = vdwg.mxu0
    %v448 = vld [vmem:[%s2 + $0x30] sm:$0xf]
    %v449 = vld [vmem:[%s2 + $0x34] sm:$0xf]
    %v450 = vld [vmem:[%s2 + $0x38] sm:$0xf]
    %v451 = vld [vmem:[%s2 + $0x3c] sm:$0xf]
    %v452 = vld [vmem:[%s3 + $0x3] sm:$0x1]
    %v453 = vlaneseq
    %v454 = vshrl.u32 %v453, 7
    %v455 = vsub.s32 0, %v454
    %v456 = vrot.slane %v452, %v455
    %v461 = vunpack.c.l.b16 %v448
    %v462 = vunpack.c.l.b16 %v449
    %v463 = vunpack.c.l.b16 %v450
    %v464 = vunpack.c.l.b16 %v451
    %v465 = vpack.c.b16 %v462, %v461
    %v466 = vpack.c.b16 %v464, %v463
    %469 = vmatprep.subr.bf16.mxu0 0
    %470 = vmatpush1.bf16.msra.mxu0 %v465
    %471 = vmatprep.subr.bf16.mxu0 0
    %472 = vmatpush1.bf16.msra.mxu0 %v466
    %473 = vmatprep.subr.bf16.mxu0 0
    %474 = vmatpush1.bf16.msra.mxu0 0
    %475 = vmatprep.subr.bf16.mxu0 0
    %476 = vmatpush1.bf16.msra.mxu0 0
    %477 = vmatprep.subr.bf16.mxu0 0
    %478 = vmatpush1.bf16.msra.mxu0 0
    %479 = vmatprep.subr.bf16.mxu0 0
    %480 = vmatpush1.bf16.msra.mxu0 0
    %481 = vmatprep.subr.bf16.mxu0 0
    %482 = vmatpush1.bf16.msra.mxu0 0
    %483 = vmatprep.subr.bf16.mxu0 0
    %484 = vmatpush1.bf16.msra.mxu0 0
    %485 = vmatprep.subr.bf16.mxu0 0
    %486 = vmatpush1.bf16.msra.mxu0 0
    %487 = vmatprep.subr.bf16.mxu0 0
    %488 = vmatpush1.bf16.msra.mxu0 0
    %489 = vmatprep.subr.bf16.mxu0 0
    %490 = vmatpush1.bf16.msra.mxu0 0
    %491 = vmatprep.subr.bf16.mxu0 0
    %492 = vmatpush1.bf16.msra.mxu0 0
    %493 = vmatprep.subr.bf16.mxu0 0
    %494 = vmatpush1.bf16.msra.mxu0 0
    %495 = vmatprep.subr.bf16.mxu0 0
    %496 = vmatpush1.bf16.msra.mxu0 0
    %497 = vmatprep.subr.bf16.mxu0 0
    %498 = vmatpush1.bf16.msra.mxu0 0
    %499 = vmatprep.subr.bf16.mxu0 0
    %500 = vmatpush1.bf16.msra.mxu0 0
    %501 = vmatprep.mubr.bf16.mxu0 0
    %502 = vmatmul.mubr.bf16.gmra.mrb[0].mxu0 %v94
    %v503 = vpop.f32.mrb[0].mxu0
    %v504 = vadd.f32 %v456, %v503
    %v505 = vpop.f32.mrb[0].mxu0
    %v506 = vpop.f32.mrb[0].mxu0
    %v507 = vadd.f32 %v456, %v506
    %v508 = vpop.f32.mrb[0].mxu0
    %509 = vdwg.mxu0
    %v510 = vld [vmem:[%s2 + $0x50] sm:$0xf]
    %v511 = vld [vmem:[%s2 + $0x54] sm:$0xf]
    %v512 = vld [vmem:[%s2 + $0x58] sm:$0xf]
    %v513 = vld [vmem:[%s2 + $0x5c] sm:$0xf]
    %v514 = vld [vmem:[%s3 + $0x5] sm:$0x1]
    %v515 = vlaneseq
    %v516 = vshrl.u32 %v515, 7
    %v517 = vsub.s32 0, %v516
    %v518 = vrot.slane %v514, %v517
    %v523 = vunpack.c.l.b16 %v510
    %v524 = vunpack.c.l.b16 %v511
    %v525 = vunpack.c.l.b16 %v512
    %v526 = vunpack.c.l.b16 %v513
    %v527 = vpack.c.b16 %v524, %v523
    %v528 = vpack.c.b16 %v526, %v525
    %531 = vmatprep.subr.bf16.mxu0 0
    %532 = vmatpush1.bf16.msra.mxu0 %v527
    %533 = vmatprep.subr.bf16.mxu0 0
    %534 = vmatpush1.bf16.msra.mxu0 %v528
    %535 = vmatprep.subr.bf16.mxu0 0
    %536 = vmatpush1.bf16.msra.mxu0 0
    %537 = vmatprep.subr.bf16.mxu0 0
    %538 = vmatpush1.bf16.msra.mxu0 0
    %539 = vmatprep.subr.bf16.mxu0 0
    %540 = vmatpush1.bf16.msra.mxu0 0
    %541 = vmatprep.subr.bf16.mxu0 0
    %542 = vmatpush1.bf16.msra.mxu0 0
    %543 = vmatprep.subr.bf16.mxu0 0
    %544 = vmatpush1.bf16.msra.mxu0 0
    %545 = vmatprep.subr.bf16.mxu0 0
    %546 = vmatpush1.bf16.msra.mxu0 0
    %547 = vmatprep.subr.bf16.mxu0 0
    %548 = vmatpush1.bf16.msra.mxu0 0
    %549 = vmatprep.subr.bf16.mxu0 0
    %550 = vmatpush1.bf16.msra.mxu0 0
    %551 = vmatprep.subr.bf16.mxu0 0
    %552 = vmatpush1.bf16.msra.mxu0 0
    %553 = vmatprep.subr.bf16.mxu0 0
    %554 = vmatpush1.bf16.msra.mxu0 0
    %555 = vmatprep.subr.bf16.mxu0 0
    %556 = vmatpush1.bf16.msra.mxu0 0
    %557 = vmatprep.subr.bf16.mxu0 0
    %558 = vmatpush1.bf16.msra.mxu0 0
    %559 = vmatprep.subr.bf16.mxu0 0
    %560 = vmatpush1.bf16.msra.mxu0 0
    %561 = vmatprep.subr.bf16.mxu0 0
    %562 = vmatpush1.bf16.msra.mxu0 0
    %563 = vmatprep.mubr.bf16.mxu0 0
    %564 = vmatmul.mubr.bf16.gmra.mrb[0].mxu0 %v94
    %v565 = vpop.f32.mrb[0].mxu0
    %v566 = vadd.f32 %v518, %v565
    %v567 = vpop.f32.mrb[0].mxu0
    %v568 = vpop.f32.mrb[0].mxu0
    %v569 = vadd.f32 %v518, %v568
    %v570 = vpop.f32.mrb[0].mxu0
    %571 = vdwg.mxu0
    %v572 = vpack.c.bf16 %v445, %v442
    %v573 = vpack.c.bf16 %v507, %v504
    %v575 = vsel %vm263, %v572, 0
    %v578 = vsel %vm263, %v573, 0
    %580 = vmatprep.subr.bf16.mxu0 0
    %581 = vmatpush1.bf16.xpose.msra.mxu0 %v578
    %582 = vmatprep.subr.bf16.mxu0 0
    %583 = vmatpush1.bf16.xpose.msra.mxu0 0
    %584 = vmatprep.subr.bf16.mxu0 0
    %585 = vmatpush1.bf16.xpose.msra.mxu0 0
    %586 = vmatprep.subr.bf16.mxu0 0
    %587 = vmatpush1.bf16.xpose.msra.mxu0 0
    %588 = vmatprep.subr.bf16.mxu0 0
    %589 = vmatpush1.bf16.xpose.msra.mxu0 0
    %590 = vmatprep.subr.bf16.mxu0 0
    %591 = vmatpush1.bf16.xpose.msra.mxu0 0
    %592 = vmatprep.subr.bf16.mxu0 0
    %593 = vmatpush1.bf16.xpose.msra.mxu0 0
    %594 = vmatprep.subr.bf16.mxu0 0
    %595 = vmatpush1.bf16.xpose.msra.mxu0 0
    %596 = vmatprep.subr.bf16.mxu0 0
    %597 = vmatpush1.bf16.xpose.msra.mxu0 0
    %598 = vmatprep.subr.bf16.mxu0 0
    %599 = vmatpush1.bf16.xpose.msra.mxu0 0
    %600 = vmatprep.subr.bf16.mxu0 0
    %601 = vmatpush1.bf16.xpose.msra.mxu0 0
    %602 = vmatprep.subr.bf16.mxu0 0
    %603 = vmatpush1.bf16.xpose.msra.mxu0 0
    %604 = vmatprep.subr.bf16.mxu0 0
    %605 = vmatpush1.bf16.xpose.msra.mxu0 0
    %606 = vmatprep.subr.bf16.mxu0 0
    %607 = vmatpush1.bf16.xpose.msra.mxu0 0
    %608 = vmatprep.subr.bf16.mxu0 0
    %609 = vmatpush1.bf16.xpose.msra.mxu0 0
    %610 = vmatprep.subr.bf16.mxu0 0
    %611 = vmatpush1.bf16.xpose.msra.mxu0 0
    %612 = vmatprep.mubr.bf16.mxu0 0
    %613 = vmatmul.mubr.bf16.gmra.mrb[0].mxu0 %v575
    %v614 = vpop.f32.mrb[0].mxu0
    %v615 = vadd.f32 0.0, %v614
    %v616 = vpop.f32.mrb[0].mxu0
    %v617 = vpop.f32.mrb[0].mxu0
    %v618 = vadd.f32 0.0, %v617
    %v619 = vpop.f32.mrb[0].mxu0
    %620 = vdwg.mxu0
    %v621 = vmul.f32 %v615, 0.25
    %v622 = vmul.f32 %v618, 0.25
    %v623 = vadd.f32 %v621, %v69
    %v624 = vadd.f32 %v622, %v70
    %v625 = vsel %vm263, %v623, -inf
    %626 = vmax.xlane.f32.xlu0 %v625
    %v627 = vpop.xlane.xlu0 %626
    %v628 = vsel %vm263, %v624, -inf
    %629 = vmax.xlane.f32.xlu0 %v628
    %v630 = vpop.xlane.xlu0 %629
    %v631 = vsub.f32 %v623, %v627
    %v632 = vsub.f32 %v624, %v630
    %v633 = vmul.f32 %v631, 1.442695
    %v634 = vpow.pop %v633
    %v635 = vmul.f32 %v632, 1.442695
    %v636 = vpow.pop %v635
    %v637 = vsel %vm263, %v634, 0.0
    %638 = vadd.xlane.f32.xlu0 %v637
    %v639 = vpop.xlane.xlu0 %638
    %v640 = vsel %vm263, %v636, 0.0
    %641 = vadd.xlane.f32.xlu0 %v640
    %v642 = vpop.xlane.xlu0 %641
    %v643 = vrcp.pop %v639
    %v644 = vrcp.pop %v642
    %v645 = vmul.f32 %v634, %v643
    %v646 = vmul.f32 %v636, %v644
    %v647 = vpack.c.bf16 %v646, %v645
    %v648 = vpack.c.bf16 %v569, %v566
    %v650 = vsel %vm263, %v647, 0
    %652 = vmatprep.subr.bf16.mxu0 0
    %653 = vmatpush1.bf16.msra.mxu0 %v648
    %654 = vmatprep.subr.bf16.mxu0 0
    %655 = vmatpush1.bf16.msra.mxu0 0
    %656 = vmatprep.subr.bf16.mxu0 0
    %657 = vmatpush1.bf16.msra.mxu0 0
    %658 = vmatprep.subr.bf16.mxu0 0
    %659 = vmatpush1.bf16.msra.mxu0 0
    %660 = vmatprep.subr.bf16.mxu0 0
    %661 = vmatpush1.bf16.msra.mxu0 0
    %662 = vmatprep.subr.bf16.mxu0 0
    %663 = vmatpush1.bf16.msra.mxu0 0
    %664 = vmatprep.subr.bf16.mxu0 0
    %665 = vmatpush1.bf16.msra.mxu0 0
    %666 = vmatprep.subr.bf16.mxu0 0
    %667 = vmatpush1.bf16.msra.mxu0 0
    %668 = vmatprep.subr.bf16.mxu0 0
    %669 = vmatpush1.bf16.msra.mxu0 0
    %670 = vmatprep.subr.bf16.mxu0 0
    %671 = vmatpush1.bf16.msra.mxu0 0
    %672 = vmatprep.subr.bf16.mxu0 0
    %673 = vmatpush1.bf16.msra.mxu0 0
    %674 = vmatprep.subr.bf16.mxu0 0
    %675 = vmatpush1.bf16.msra.mxu0 0
    %676 = vmatprep.subr.bf16.mxu0 0
    %677 = vmatpush1.bf16.msra.mxu0 0
    %678 = vmatprep.subr.bf16.mxu0 0
    %679 = vmatpush1.bf16.msra.mxu0 0
    %680 = vmatprep.subr.bf16.mxu0 0
    %681 = vmatpush1.bf16.msra.mxu0 0
    %682 = vmatprep.subr.bf16.mxu0 0
    %683 = vmatpush1.bf16.msra.mxu0 0
    %684 = vmatprep.mubr.bf16.mxu0 0
    %685 = vmatmul.mubr.bf16.gmra.mrb[0].mxu0 %v650
    %v686 = vpop.f32.mrb[0].mxu0
    %v687 = vadd.f32 0.0, %v686
    %v688 = vpop.f32.mrb[0].mxu0
    %v689 = vpop.f32.mrb[0].mxu0
    %v690 = vadd.f32 0.0, %v689
    %v691 = vpop.f32.mrb[0].mxu0
    %692 = vdwg.mxu0
    %v693 = vld [vmem:[%s2 + $0x68] sm:$0xf]
    %v694 = vld [vmem:[%s2 + $0x6c] sm:$0xf]
    %v695 = vpack.c.bf16 %v690, %v687
    %v698 = vunpack.c.l.b16 %v693
    %v699 = vunpack.c.l.b16 %v694
    %v700 = vpack.c.b16 %v699, %v698
    %v703 = vsel %vm263, %v695, 0
    %705 = vmatprep.subr.bf16.mxu0 0
    %706 = vmatpush1.bf16.msra.mxu0 %v700
    %707 = vmatprep.subr.bf16.mxu0 0
    %708 = vmatpush1.bf16.msra.mxu0 0
    %709 = vmatprep.subr.bf16.mxu0 0
    %710 = vmatpush1.bf16.msra.mxu0 0
    %711 = vmatprep.subr.bf16.mxu0 0
    %712 = vmatpush1.bf16.msra.mxu0 0
    %713 = vmatprep.subr.bf16.mxu0 0
    %714 = vmatpush1.bf16.msra.mxu0 0
    %715 = vmatprep.subr.bf16.mxu0 0
    %716 = vmatpush1.bf16.msra.mxu0 0
    %717 = vmatprep.subr.bf16.mxu0 0
    %718 = vmatpush1.bf16.msra.mxu0 0
    %719 = vmatprep.subr.bf16.mxu0 0
    %720 = vmatpush1.bf16.msra.mxu0 0
    %721 = vmatprep.subr.bf16.mxu0 0
    %722 = vmatpush1.bf16.msra.mxu0 0
    %723 = vmatprep.subr.bf16.mxu0 0
    %724 = vmatpush1.bf16.msra.mxu0 0
    %725 = vmatprep.subr.bf16.mxu0 0
    %726 = vmatpush1.bf16.msra.mxu0 0
    %727 = vmatprep.subr.bf16.mxu0 0
    %728 = vmatpush1.bf16.msra.mxu0 0
    %729 = vmatprep.subr.bf16.mxu0 0
    %730 = vmatpush1.bf16.msra.mxu0 0
    %731 = vmatprep.subr.bf16.mxu0 0
    %732 = vmatpush1.bf16.msra.mxu0 0
    %733 = vmatprep.subr.bf16.mxu0 0
    %734 = vmatpush1.bf16.msra.mxu0 0
    %735 = vmatprep.subr.bf16.mxu0 0
    %736 = vmatpush1.bf16.msra.mxu0 0
    %737 = vmatprep.mubr.bf16.mxu0 0
    %738 = vmatmul.mubr.bf16.gmra.mrb[0].mxu0 %v703
    %v739 = vpop.f32.mrb[0].mxu0
    %v740 = vadd.f32 0.0, %v739
    %v741 = vpop.f32.mrb[0].mxu0
    %v742 = vpop.f32.mrb[0].mxu0
    %v743 = vadd.f32 0.0, %v742
    %v744 = vpop.f32.mrb[0].mxu0
    %745 = vdwg.mxu0
    %v748 = vunpack.c.l.b16 %v383
    %v749 = vunpack.c.l.b16 %v384
    %v750 = vpack.c.b16 %v749, %v748
    %v753 = vsel %vm263, %v385, 0
    %755 = vmatprep.subr.bf16.mxu0 0
    %756 = vmatpush1.bf16.msra.mxu0 %v750
    %757 = vmatprep.subr.bf16.mxu0 0
    %758 = vmatpush1.bf16.msra.mxu0 0
    %759 = vmatprep.subr.bf16.mxu0 0
    %760 = vmatpush1.bf16.msra.mxu0 0
    %761 = vmatprep.subr.bf16.mxu0 0
    %762 = vmatpush1.bf16.msra.mxu0 0
    %763 = vmatprep.subr.bf16.mxu0 0
    %764 = vmatpush1.bf16.msra.mxu0 0
    %765 = vmatprep.subr.bf16.mxu0 0
    %766 = vmatpush1.bf16.msra.mxu0 0
    %767 = vmatprep.subr.bf16.mxu0 0
    %768 = vmatpush1.bf16.msra.mxu0 0
    %769 = vmatprep.subr.bf16.mxu0 0
    %770 = vmatpush1.bf16.msra.mxu0 0
    %771 = vmatprep.subr.bf16.mxu0 0
    %772 = vmatpush1.bf16.msra.mxu0 0
    %773 = vmatprep.subr.bf16.mxu0 0
    %774 = vmatpush1.bf16.msra.mxu0 0
    %775 = vmatprep.subr.bf16.mxu0 0
    %776 = vmatpush1.bf16.msra.mxu0 0
    %777 = vmatprep.subr.bf16.mxu0 0
    %778 = vmatpush1.bf16.msra.mxu0 0
    %779 = vmatprep.subr.bf16.mxu0 0
    %780 = vmatpush1.bf16.msra.mxu0 0
    %781 = vmatprep.subr.bf16.mxu0 0
    %782 = vmatpush1.bf16.msra.mxu0 0
    %783 = vmatprep.subr.bf16.mxu0 0
    %784 = vmatpush1.bf16.msra.mxu0 0
    %785 = vmatprep.subr.bf16.mxu0 0
    %786 = vmatpush1.bf16.msra.mxu0 0
    %787 = vmatprep.mubr.bf16.mxu0 0
    %788 = vmatmul.mubr.bf16.gmra.mrb[0].mxu0 %v753
    %v789 = vpop.f32.mrb[0].mxu0
    %v790 = vadd.f32 %v740, %v789
    %v791 = vpop.f32.mrb[0].mxu0
    %v792 = vpop.f32.mrb[0].mxu0
    %v793 = vadd.f32 %v743, %v792
    %v794 = vpop.f32.mrb[0].mxu0
    %795 = vdwg.mxu0
    %v796 = vld [vmem:[%s3 + $0x6] sm:$0x1]
    %v797 = vlaneseq
    %v798 = vshrl.u32 %v797, 7
    %v799 = vsub.s32 0, %v798
    %v800 = vrot.slane %v796, %v799
    %v801 = vadd.f32 %v790, %v800
    %v802 = vadd.f32 %v793, %v800
    %v803 = vadd.f32 %v801, %v67
    %v804 = vadd.f32 %v802, %v68
    %v805 = vld [vmem:[%s3 + $0x7] sm:$0x1]
    %v806 = vld [vmem:[%s3 + $0x8] sm:$0x1]
    %v807 = vsel %vm29, %v803, 0.0
    %808 = vadd.xlane.f32.xlu0 %v807
    %v809 = vpop.xlane.xlu0 %808
    %v810 = vsel %vm29, %v804, 0.0
    %811 = vadd.xlane.f32.xlu0 %v810
    %v812 = vpop.xlane.xlu0 %811
    %v813 = vmul.f32 %v809, %v36
    %v814 = vmul.f32 %v812, %v36
    %v815 = vsub.f32 %v803, %v813
    %v816 = vsub.f32 %v804, %v814
    %v817 = vmul.f32 %v815, %v815
    %v818 = vmul.f32 %v816, %v816
    %v819 = vsel %vm29, %v817, 0.0
    %820 = vadd.xlane.f32.xlu0 %v819
    %v821 = vpop.xlane.xlu0 %820
    %v822 = vsel %vm29, %v818, 0.0
    %823 = vadd.xlane.f32.xlu0 %v822
    %v824 = vpop.xlane.xlu0 %823
    %v825 = vmul.f32 %v821, %v36
    %v826 = vmul.f32 %v824, %v36
    %v827 = vadd.f32 %v825, 1e-12
    %v828 = vadd.f32 %v826, 1e-12
    %v829 = vrsqrt.pop %v827
    %v830 = vrsqrt.pop %v828
    %v831 = vmul.f32 %v815, %v829
    %v832 = vmul.f32 %v816, %v830
    %v833 = vlaneseq
    %v834 = vshrl.u32 %v833, 7
    %v835 = vsub.s32 0, %v834
    %v836 = vrot.slane %v805, %v835
    %v837 = vmul.f32 %v831, %v836
    %v838 = vmul.f32 %v832, %v836
    %v839 = vlaneseq
    %v840 = vshrl.u32 %v839, 7
    %v841 = vsub.s32 0, %v840
    %v842 = vrot.slane %v806, %v841
    %v843 = vadd.f32 %v837, %v842
    %v844 = vadd.f32 %v838, %v842
    %v845 = vld [vmem:[%s2 + $0x70] sm:$0xf]
    %v846 = vld [vmem:[%s2 + $0x74] sm:$0xf]
    %v847 = vld [vmem:[%s2 + $0x78] sm:$0xf]
    %v848 = vld [vmem:[%s2 + $0x7c] sm:$0xf]
    %v849 = vpack.c.bf16 %v844, %v843
    %v850 = vld [vmem:[%s3 + $0x9] sm:$0x1]
    %v851 = vlaneseq
    %v852 = vshrl.u32 %v851, 7
    %v853 = vsub.s32 0, %v852
    %v854 = vrot.slane %v850, %v853
    %v859 = vunpack.c.l.b16 %v845
    %v860 = vunpack.c.l.b16 %v846
    %v861 = vunpack.c.l.b16 %v847
    %v862 = vunpack.c.l.b16 %v848
    %v863 = vpack.c.b16 %v860, %v859
    %v864 = vpack.c.b16 %v862, %v861
    %v868 = vsel %vm29, %v849, 0
    %870 = vmatprep.subr.bf16.mxu0 0
    %871 = vmatpush1.bf16.msra.mxu0 %v863
    %872 = vmatprep.subr.bf16.mxu0 0
    %873 = vmatpush1.bf16.msra.mxu0 %v864
    %874 = vmatprep.subr.bf16.mxu0 0
    %875 = vmatpush1.bf16.msra.mxu0 0
    %876 = vmatprep.subr.bf16.mxu0 0
    %877 = vmatpush1.bf16.msra.mxu0 0
    %878 = vmatprep.subr.bf16.mxu0 0
    %879 = vmatpush1.bf16.msra.mxu0 0
    %880 = vmatprep.subr.bf16.mxu0 0
    %881 = vmatpush1.bf16.msra.mxu0 0
    %882 = vmatprep.subr.bf16.mxu0 0
    %883 = vmatpush1.bf16.msra.mxu0 0
    %884 = vmatprep.subr.bf16.mxu0 0
    %885 = vmatpush1.bf16.msra.mxu0 0
    %886 = vmatprep.subr.bf16.mxu0 0
    %887 = vmatpush1.bf16.msra.mxu0 0
    %888 = vmatprep.subr.bf16.mxu0 0
    %889 = vmatpush1.bf16.msra.mxu0 0
    %890 = vmatprep.subr.bf16.mxu0 0
    %891 = vmatpush1.bf16.msra.mxu0 0
    %892 = vmatprep.subr.bf16.mxu0 0
    %893 = vmatpush1.bf16.msra.mxu0 0
    %894 = vmatprep.subr.bf16.mxu0 0
    %895 = vmatpush1.bf16.msra.mxu0 0
    %896 = vmatprep.subr.bf16.mxu0 0
    %897 = vmatpush1.bf16.msra.mxu0 0
    %898 = vmatprep.subr.bf16.mxu0 0
    %899 = vmatpush1.bf16.msra.mxu0 0
    %900 = vmatprep.subr.bf16.mxu0 0
    %901 = vmatpush1.bf16.msra.mxu0 0
    %902 = vmatprep.mubr.bf16.mxu0 0
    %903 = vmatmul.mubr.bf16.gmra.mrb[0].mxu0 %v868
    %v904 = vpop.f32.mrb[0].mxu0
    %v905 = vadd.f32 %v854, %v904
    %v906 = vpop.f32.mrb[0].mxu0
    %v907 = vpop.f32.mrb[0].mxu0
    %v908 = vadd.f32 %v854, %v907
    %v909 = vpop.f32.mrb[0].mxu0
    %910 = vdwg.mxu0
    %v911 = vmul.f32 %v905, 0.5
    %v912 = vmul.f32 %v908, 0.5
    %v913 = vmul.f32 %v905, 0.70710677
    %v914 = vmul.f32 %v908, 0.70710677
    %v915 = verf.f32.pop %v913
    %v916 = verf.f32.pop %v914
    %v917 = vadd.f32 %v915, 1.0
    %v918 = vadd.f32 %v916, 1.0
    %v919 = vmul.f32 %v911, %v917
    %v920 = vmul.f32 %v912, %v918
    %v921 = vld [vmem:[%s2 + $0x80] sm:$0xf]
    %v922 = vld [vmem:[%s2 + $0x84] sm:$0xf]
    %v923 = vld [vmem:[%s2 + $0x88] sm:$0xf]
    %v924 = vld [vmem:[%s2 + $0x8c] sm:$0xf]
    %v925 = vld [vmem:[%s2 + $0x90] sm:$0xf]
    %v926 = vld [vmem:[%s2 + $0x94] sm:$0xf]
    %v927 = vld [vmem:[%s2 + $0x98] sm:$0xf]
    %v928 = vld [vmem:[%s2 + $0x9c] sm:$0xf]
    %v929 = vpack.c.bf16 %v920, %v919
    %v930 = vld [vmem:[%s3 + $0xa] sm:$0x1]
    %v931 = vlaneseq
    %v932 = vshrl.u32 %v931, 7
    %v933 = vsub.s32 0, %v932
    %v934 = vrot.slane %v930, %v933
    %v943 = vunpack.c.l.b16 %v921
    %v944 = vunpack.c.l.b16 %v922
    %v945 = vunpack.c.l.b16 %v923
    %v946 = vunpack.c.l.b16 %v924
    %v947 = vunpack.c.l.b16 %v925
    %v948 = vunpack.c.l.b16 %v926
    %v949 = vunpack.c.l.b16 %v927
    %v950 = vunpack.c.l.b16 %v928
    %v951 = vpack.c.b16 %v944, %v943
    %v952 = vpack.c.b16 %v946, %v945
    %v953 = vpack.c.b16 %v948, %v947
    %v954 = vpack.c.b16 %v950, %v949
    %vm959 = vcmask 523264
    %v961 = vsel %vm959, %v929, 0
    %963 = vmatprep.subr.bf16.mxu0 0
    %964 = vmatpush1.bf16.msra.mxu0 %v951
    %965 = vmatprep.subr.bf16.mxu0 0
    %966 = vmatpush1.bf16.msra.mxu0 %v952
    %967 = vmatprep.subr.bf16.mxu0 0
    %968 = vmatpush1.bf16.msra.mxu0 %v953
    %969 = vmatprep.subr.bf16.mxu0 0
    %970 = vmatpush1.bf16.msra.mxu0 %v954
    %971 = vmatprep.subr.bf16.mxu0 0
    %972 = vmatpush1.bf16.msra.mxu0 0
    %973 = vmatprep.subr.bf16.mxu0 0
    %974 = vmatpush1.bf16.msra.mxu0 0
    %975 = vmatprep.subr.bf16.mxu0 0
    %976 = vmatpush1.bf16.msra.mxu0 0
    %977 = vmatprep.subr.bf16.mxu0 0
    %978 = vmatpush1.bf16.msra.mxu0 0
    %979 = vmatprep.subr.bf16.mxu0 0
    %980 = vmatpush1.bf16.msra.mxu0 0
    %981 = vmatprep.subr.bf16.mxu0 0
    %982 = vmatpush1.bf16.msra.mxu0 0
    %983 = vmatprep.subr.bf16.mxu0 0
    %984 = vmatpush1.bf16.msra.mxu0 0
    %985 = vmatprep.subr.bf16.mxu0 0
    %986 = vmatpush1.bf16.msra.mxu0 0
    %987 = vmatprep.subr.bf16.mxu0 0
    %988 = vmatpush1.bf16.msra.mxu0 0
    %989 = vmatprep.subr.bf16.mxu0 0
    %990 = vmatpush1.bf16.msra.mxu0 0
    %991 = vmatprep.subr.bf16.mxu0 0
    %992 = vmatpush1.bf16.msra.mxu0 0
    %993 = vmatprep.subr.bf16.mxu0 0
    %994 = vmatpush1.bf16.msra.mxu0 0
    %995 = vmatprep.mubr.bf16.mxu0 0
    %996 = vmatmul.mubr.bf16.gmra.mrb[0].mxu0 %v961
    %v997 = vpop.f32.mrb[0].mxu0
    %v998 = vadd.f32 %v934, %v997
    %v999 = vpop.f32.mrb[0].mxu0
    %v1000 = vpop.f32.mrb[0].mxu0
    %v1001 = vadd.f32 %v934, %v1000
    %v1002 = vpop.f32.mrb[0].mxu0
    %1003 = vdwg.mxu0
    %v1004 = vadd.f32 %v998, %v843
    %v1005 = vadd.f32 %v1001, %v844
    %v1006 = vld [vmem:[%s3 + $0xb] sm:$0x1]
    %v1007 = vld [vmem:[%s3 + $0xc] sm:$0x1]
    %v1008 = vsel %vm29, %v1004, 0.0
    %1009 = vadd.xlane.f32.xlu0 %v1008
    %v1010 = vpop.xlane.xlu0 %1009
    %v1011 = vsel %vm29, %v1005, 0.0
    %1012 = vadd.xlane.f32.xlu0 %v1011
    %v1013 = vpop.xlane.xlu0 %1012
    %v1014 = vmul.f32 %v1010, %v36
    %v1015 = vmul.f32 %v1013, %v36
    %v1016 = vsub.f32 %v1004, %v1014
    %v1017 = vsub.f32 %v1005, %v1015
    %v1018 = vmul.f32 %v1016, %v1016
    %v1019 = vmul.f32 %v1017, %v1017
    %v1020 = vsel %vm29, %v1018, 0.0
    %1021 = vadd.xlane.f32.xlu0 %v1020
    %v1022 = vpop.xlane.xlu0 %1021
    %v1023 = vsel %vm29, %v1019, 0.0
    %1024 = vadd.xlane.f32.xlu0 %v1023
    %v1025 = vpop.xlane.xlu0 %1024
    %v1026 = vmul.f32 %v1022, %v36
    %v1027 = vmul.f32 %v1025, %v36
    %v1028 = vadd.f32 %v1026, 1e-12
    %v1029 = vadd.f32 %v1027, 1e-12
    %v1030 = vrsqrt.pop %v1028
    %v1031 = vrsqrt.pop %v1029
    %v1032 = vmul.f32 %v1016, %v1030
    %v1033 = vmul.f32 %v1017, %v1031
    %v1034 = vlaneseq
    %v1035 = vshrl.u32 %v1034, 7
    %v1036 = vsub.s32 0, %v1035
    %v1037 = vrot.slane %v1006, %v1036
    %v1038 = vmul.f32 %v1032, %v1037
    %v1039 = vmul.f32 %v1033, %v1037
    %v1040 = vlaneseq
    %v1041 = vshrl.u32 %v1040, 7
    %v1042 = vsub.s32 0, %v1041
    %v1043 = vrot.slane %v1007, %v1042
    %v1044 = vadd.f32 %v1038, %v1043
    %v1045 = vadd.f32 %v1039, %v1043
    %v1046 = vpack.c.bf16 %v1045, %v1044
    %s1047 = scalar_lea.vmem %s2, 160
    %v1048 = vld [vmem:[%s1047] sm:$0xf]
    %v1049 = vld [vmem:[%s1047 + $0x4] sm:$0xf]
    %v1050 = vld [vmem:[%s1047 + $0x8] sm:$0xf]
    %v1051 = vld [vmem:[%s1047 + $0xc] sm:$0xf]
    %s1052 = scalar_lea.vmem %s3, 16
    %v1053 = vld [vmem:[%s1052] sm:$0x1]
    %v1054 = vlaneseq
    %v1055 = vshrl.u32 %v1054, 7
    %v1056 = vsub.s32 0, %v1055
    %v1057 = vrot.slane %v1053, %v1056
    %v1062 = vunpack.c.l.b16 %v1048
    %v1063 = vunpack.c.l.b16 %v1049
    %v1064 = vunpack.c.l.b16 %v1050
    %v1065 = vunpack.c.l.b16 %v1051
    %v1066 = vpack.c.b16 %v1063, %v1062
    %v1067 = vpack.c.b16 %v1065, %v1064
    %v1071 = vsel %vm29, %v1046, 0
    %1073 = vmatprep.subr.bf16.mxu0 0
    %1074 = vmatpush1.bf16.msra.mxu0 %v1066
    %1075 = vmatprep.subr.bf16.mxu0 0
    %1076 = vmatpush1.bf16.msra.mxu0 %v1067
    %1077 = vmatprep.subr.bf16.mxu0 0
    %1078 = vmatpush1.bf16.msra.mxu0 0
    %1079 = vmatprep.subr.bf16.mxu0 0
    %1080 = vmatpush1.bf16.msra.mxu0 0
    %1081 = vmatprep.subr.bf16.mxu0 0
    %1082 = vmatpush1.bf16.msra.mxu0 0
    %1083 = vmatprep.subr.bf16.mxu0 0
    %1084 = vmatpush1.bf16.msra.mxu0 0
    %1085 = vmatprep.subr.bf16.mxu0 0
    %1086 = vmatpush1.bf16.msra.mxu0 0
    %1087 = vmatprep.subr.bf16.mxu0 0
    %1088 = vmatpush1.bf16.msra.mxu0 0
    %1089 = vmatprep.subr.bf16.mxu0 0
    %1090 = vmatpush1.bf16.msra.mxu0 0
    %1091 = vmatprep.subr.bf16.mxu0 0
    %1092 = vmatpush1.bf16.msra.mxu0 0
    %1093 = vmatprep.subr.bf16.mxu0 0
    %1094 = vmatpush1.bf16.msra.mxu0 0
    %1095 = vmatprep.subr.bf16.mxu0 0
    %1096 = vmatpush1.bf16.msra.mxu0 0
    %1097 = vmatprep.subr.bf16.mxu0 0
    %1098 = vmatpush1.bf16.msra.mxu0 0
    %1099 = vmatprep.subr.bf16.mxu0 0
    %1100 = vmatpush1.bf16.msra.mxu0 0
    %1101 = vmatprep.subr.bf16.mxu0 0
    %1102 = vmatpush1.bf16.msra.mxu0 0
    %1103 = vmatprep.subr.bf16.mxu0 0
    %1104 = vmatpush1.bf16.msra.mxu0 0
    %1105 = vmatprep.mubr.bf16.mxu0 0
    %1106 = vmatmul.mubr.bf16.gmra.mrb[0].mxu0 %v1071
    %v1107 = vpop.f32.mrb[0].mxu0
    %v1108 = vadd.f32 %v1057, %v1107
    %v1109 = vpop.f32.mrb[0].mxu0
    %v1110 = vpop.f32.mrb[0].mxu0
    %v1111 = vadd.f32 %v1057, %v1110
    %v1112 = vpop.f32.mrb[0].mxu0
    %1113 = vdwg.mxu0
    %v1114 = vld [vmem:[%s1047 + $0x20] sm:$0xf]
    %v1115 = vld [vmem:[%s1047 + $0x24] sm:$0xf]
    %v1116 = vld [vmem:[%s1047 + $0x28] sm:$0xf]
    %v1117 = vld [vmem:[%s1047 + $0x2c] sm:$0xf]
    %v1118 = vld [vmem:[%s1052 + $0x2] sm:$0x1]
    %v1119 = vlaneseq
    %v1120 = vshrl.u32 %v1119, 7
    %v1121 = vsub.s32 0, %v1120
    %v1122 = vrot.slane %v1118, %v1121
    %v1127 = vunpack.c.l.b16 %v1114
    %v1128 = vunpack.c.l.b16 %v1115
    %v1129 = vunpack.c.l.b16 %v1116
    %v1130 = vunpack.c.l.b16 %v1117
    %v1131 = vpack.c.b16 %v1128, %v1127
    %v1132 = vpack.c.b16 %v1130, %v1129
    %1135 = vmatprep.subr.bf16.mxu0 0
    %1136 = vmatpush1.bf16.msra.mxu0 %v1131
    %1137 = vmatprep.subr.bf16.mxu0 0
    %1138 = vmatpush1.bf16.msra.mxu0 %v1132
    %1139 = vmatprep.subr.bf16.mxu0 0
    %1140 = vmatpush1.bf16.msra.mxu0 0
    %1141 = vmatprep.subr.bf16.mxu0 0
    %1142 = vmatpush1.bf16.msra.mxu0 0
    %1143 = vmatprep.subr.bf16.mxu0 0
    %1144 = vmatpush1.bf16.msra.mxu0 0
    %1145 = vmatprep.subr.bf16.mxu0 0
    %1146 = vmatpush1.bf16.msra.mxu0 0
    %1147 = vmatprep.subr.bf16.mxu0 0
    %1148 = vmatpush1.bf16.msra.mxu0 0
    %1149 = vmatprep.subr.bf16.mxu0 0
    %1150 = vmatpush1.bf16.msra.mxu0 0
    %1151 = vmatprep.subr.bf16.mxu0 0
    %1152 = vmatpush1.bf16.msra.mxu0 0
    %1153 = vmatprep.subr.bf16.mxu0 0
    %1154 = vmatpush1.bf16.msra.mxu0 0
    %1155 = vmatprep.subr.bf16.mxu0 0
    %1156 = vmatpush1.bf16.msra.mxu0 0
    %1157 = vmatprep.subr.bf16.mxu0 0
    %1158 = vmatpush1.bf16.msra.mxu0 0
    %1159 = vmatprep.subr.bf16.mxu0 0
    %1160 = vmatpush1.bf16.msra.mxu0 0
    %1161 = vmatprep.subr.bf16.mxu0 0
    %1162 = vmatpush1.bf16.msra.mxu0 0
    %1163 = vmatprep.subr.bf16.mxu0 0
    %1164 = vmatpush1.bf16.msra.mxu0 0
    %1165 = vmatprep.subr.bf16.mxu0 0
    %1166 = vmatpush1.bf16.msra.mxu0 0
    %1167 = vmatprep.mubr.bf16.mxu0 0
    %1168 = vmatmul.mubr.bf16.gmra.mrb[0].mxu0 %v1071
    %v1169 = vpop.f32.mrb[0].mxu0
    %v1170 = vadd.f32 %v1122, %v1169
    %v1171 = vpop.f32.mrb[0].mxu0
    %v1172 = vpop.f32.mrb[0].mxu0
    %v1173 = vadd.f32 %v1122, %v1172
    %v1174 = vpop.f32.mrb[0].mxu0
    %1175 = vdwg.mxu0
    %v1176 = vld [vmem:[%s1047 + $0x40] sm:$0xf]
    %v1177 = vld [vmem:[%s1047 + $0x44] sm:$0xf]
    %v1178 = vld [vmem:[%s1047 + $0x48] sm:$0xf]
    %v1179 = vld [vmem:[%s1047 + $0x4c] sm:$0xf]
    %v1180 = vld [vmem:[%s1052 + $0x4] sm:$0x1]
    %v1181 = vlaneseq
    %v1182 = vshrl.u32 %v1181, 7
    %v1183 = vsub.s32 0, %v1182
    %v1184 = vrot.slane %v1180, %v1183
    %v1189 = vunpack.c.l.b16 %v1176
    %v1190 = vunpack.c.l.b16 %v1177
    %v1191 = vunpack.c.l.b16 %v1178
    %v1192 = vunpack.c.l.b16 %v1179
    %v1193 = vpack.c.b16 %v1190, %v1189
    %v1194 = vpack.c.b16 %v1192, %v1191
    %1197 = vmatprep.subr.bf16.mxu0 0
    %1198 = vmatpush1.bf16.msra.mxu0 %v1193
    %1199 = vmatprep.subr.bf16.mxu0 0
    %1200 = vmatpush1.bf16.msra.mxu0 %v1194
    %1201 = vmatprep.subr.bf16.mxu0 0
    %1202 = vmatpush1.bf16.msra.mxu0 0
    %1203 = vmatprep.subr.bf16.mxu0 0
    %1204 = vmatpush1.bf16.msra.mxu0 0
    %1205 = vmatprep.subr.bf16.mxu0 0
    %1206 = vmatpush1.bf16.msra.mxu0 0
    %1207 = vmatprep.subr.bf16.mxu0 0
    %1208 = vmatpush1.bf16.msra.mxu0 0
    %1209 = vmatprep.subr.bf16.mxu0 0
    %1210 = vmatpush1.bf16.msra.mxu0 0
    %1211 = vmatprep.subr.bf16.mxu0 0
    %1212 = vmatpush1.bf16.msra.mxu0 0
    %1213 = vmatprep.subr.bf16.mxu0 0
    %1214 = vmatpush1.bf16.msra.mxu0 0
    %1215 = vmatprep.subr.bf16.mxu0 0
    %1216 = vmatpush1.bf16.msra.mxu0 0
    %1217 = vmatprep.subr.bf16.mxu0 0
    %1218 = vmatpush1.bf16.msra.mxu0 0
    %1219 = vmatprep.subr.bf16.mxu0 0
    %1220 = vmatpush1.bf16.msra.mxu0 0
    %1221 = vmatprep.subr.bf16.mxu0 0
    %1222 = vmatpush1.bf16.msra.mxu0 0
    %1223 = vmatprep.subr.bf16.mxu0 0
    %1224 = vmatpush1.bf16.msra.mxu0 0
    %1225 = vmatprep.subr.bf16.mxu0 0
    %1226 = vmatpush1.bf16.msra.mxu0 0
    %1227 = vmatprep.subr.bf16.mxu0 0
    %1228 = vmatpush1.bf16.msra.mxu0 0
    %1229 = vmatprep.mubr.bf16.mxu0 0
    %1230 = vmatmul.mubr.bf16.gmra.mrb[0].mxu0 %v1071
    %v1231 = vpop.f32.mrb[0].mxu0
    %v1232 = vadd.f32 %v1184, %v1231
    %v1233 = vpop.f32.mrb[0].mxu0
    %v1234 = vpop.f32.mrb[0].mxu0
    %v1235 = vadd.f32 %v1184, %v1234
    %v1236 = vpop.f32.mrb[0].mxu0
    %1237 = vdwg.mxu0
    %v1238 = vpack.c.bf16 %v1111, %v1108
    %v1239 = vpack.c.bf16 %v1173, %v1170
    %v1241 = vsel %vm263, %v1238, 0
    %v1244 = vsel %vm263, %v1239, 0
    %1246 = vmatprep.subr.bf16.mxu0 0
    %1247 = vmatpush1.bf16.xpose.msra.mxu0 %v1244
    %1248 = vmatprep.subr.bf16.mxu0 0
    %1249 = vmatpush1.bf16.xpose.msra.mxu0 0
    %1250 = vmatprep.subr.bf16.mxu0 0
    %1251 = vmatpush1.bf16.xpose.msra.mxu0 0
    %1252 = vmatprep.subr.bf16.mxu0 0
    %1253 = vmatpush1.bf16.xpose.msra.mxu0 0
    %1254 = vmatprep.subr.bf16.mxu0 0
    %1255 = vmatpush1.bf16.xpose.msra.mxu0 0
    %1256 = vmatprep.subr.bf16.mxu0 0
    %1257 = vmatpush1.bf16.xpose.msra.mxu0 0
    %1258 = vmatprep.subr.bf16.mxu0 0
    %1259 = vmatpush1.bf16.xpose.msra.mxu0 0
    %1260 = vmatprep.subr.bf16.mxu0 0
    %1261 = vmatpush1.bf16.xpose.msra.mxu0 0
    %1262 = vmatprep.subr.bf16.mxu0 0
    %1263 = vmatpush1.bf16.xpose.msra.mxu0 0
    %1264 = vmatprep.subr.bf16.mxu0 0
    %1265 = vmatpush1.bf16.xpose.msra.mxu0 0
    %1266 = vmatprep.subr.bf16.mxu0 0
    %1267 = vmatpush1.bf16.xpose.msra.mxu0 0
    %1268 = vmatprep.subr.bf16.mxu0 0
    %1269 = vmatpush1.bf16.xpose.msra.mxu0 0
    %1270 = vmatprep.subr.bf16.mxu0 0
    %1271 = vmatpush1.bf16.xpose.msra.mxu0 0
    %1272 = vmatprep.subr.bf16.mxu0 0
    %1273 = vmatpush1.bf16.xpose.msra.mxu0 0
    %1274 = vmatprep.subr.bf16.mxu0 0
    %1275 = vmatpush1.bf16.xpose.msra.mxu0 0
    %1276 = vmatprep.subr.bf16.mxu0 0
    %1277 = vmatpush1.bf16.xpose.msra.mxu0 0
    %1278 = vmatprep.mubr.bf16.mxu0 0
    %1279 = vmatmul.mubr.bf16.gmra.mrb[0].mxu0 %v1241
    %v1280 = vpop.f32.mrb[0].mxu0
    %v1281 = vadd.f32 0.0, %v1280
    %v1282 = vpop.f32.mrb[0].mxu0
    %v1283 = vpop.f32.mrb[0].mxu0
    %v1284 = vadd.f32 0.0, %v1283
    %v1285 = vpop.f32.mrb[0].mxu0
    %1286 = vdwg.mxu0
    %v1287 = vmul.f32 %v1281, 0.25
    %v1288 = vmul.f32 %v1284, 0.25
    %v1289 = vadd.f32 %v1287, %v69
    %v1290 = vadd.f32 %v1288, %v70
    %v1291 = vsel %vm263, %v1289, -inf
    %1292 = vmax.xlane.f32.xlu0 %v1291
    %v1293 = vpop.xlane.xlu0 %1292
    %v1294 = vsel %vm263, %v1290, -inf
    %1295 = vmax.xlane.f32.xlu0 %v1294
    %v1296 = vpop.xlane.xlu0 %1295
    %v1297 = vsub.f32 %v1289, %v1293
    %v1298 = vsub.f32 %v1290, %v1296
    %v1299 = vmul.f32 %v1297, 1.442695
    %v1300 = vpow.pop %v1299
    %v1301 = vmul.f32 %v1298, 1.442695
    %v1302 = vpow.pop %v1301
    %v1303 = vsel %vm263, %v1300, 0.0
    %1304 = vadd.xlane.f32.xlu0 %v1303
    %v1305 = vpop.xlane.xlu0 %1304
    %v1306 = vsel %vm263, %v1302, 0.0
    %1307 = vadd.xlane.f32.xlu0 %v1306
    %v1308 = vpop.xlane.xlu0 %1307
    %v1309 = vrcp.pop %v1305
    %v1310 = vrcp.pop %v1308
    %v1311 = vmul.f32 %v1300, %v1309
    %v1312 = vmul.f32 %v1302, %v1310
    %v1313 = vpack.c.bf16 %v1312, %v1311
    %v1314 = vpack.c.bf16 %v1235, %v1232
    %v1316 = vsel %vm263, %v1313, 0
    %1318 = vmatprep.subr.bf16.mxu0 0
    %1319 = vmatpush1.bf16.msra.mxu0 %v1314
    %1320 = vmatprep.subr.bf16.mxu0 0
    %1321 = vmatpush1.bf16.msra.mxu0 0
    %1322 = vmatprep.subr.bf16.mxu0 0
    %1323 = vmatpush1.bf16.msra.mxu0 0
    %1324 = vmatprep.subr.bf16.mxu0 0
    %1325 = vmatpush1.bf16.msra.mxu0 0
    %1326 = vmatprep.subr.bf16.mxu0 0
    %1327 = vmatpush1.bf16.msra.mxu0 0
    %1328 = vmatprep.subr.bf16.mxu0 0
    %1329 = vmatpush1.bf16.msra.mxu0 0
    %1330 = vmatprep.subr.bf16.mxu0 0
    %1331 = vmatpush1.bf16.msra.mxu0 0
    %1332 = vmatprep.subr.bf16.mxu0 0
    %1333 = vmatpush1.bf16.msra.mxu0 0
    %1334 = vmatprep.subr.bf16.mxu0 0
    %1335 = vmatpush1.bf16.msra.mxu0 0
    %1336 = vmatprep.subr.bf16.mxu0 0
    %1337 = vmatpush1.bf16.msra.mxu0 0
    %1338 = vmatprep.subr.bf16.mxu0 0
    %1339 = vmatpush1.bf16.msra.mxu0 0
    %1340 = vmatprep.subr.bf16.mxu0 0
    %1341 = vmatpush1.bf16.msra.mxu0 0
    %1342 = vmatprep.subr.bf16.mxu0 0
    %1343 = vmatpush1.bf16.msra.mxu0 0
    %1344 = vmatprep.subr.bf16.mxu0 0
    %1345 = vmatpush1.bf16.msra.mxu0 0
    %1346 = vmatprep.subr.bf16.mxu0 0
    %1347 = vmatpush1.bf16.msra.mxu0 0
    %1348 = vmatprep.subr.bf16.mxu0 0
    %1349 = vmatpush1.bf16.msra.mxu0 0
    %1350 = vmatprep.mubr.bf16.mxu0 0
    %1351 = vmatmul.mubr.bf16.gmra.mrb[0].mxu0 %v1316
    %v1352 = vpop.f32.mrb[0].mxu0
    %v1353 = vadd.f32 0.0, %v1352
    %v1354 = vpop.f32.mrb[0].mxu0
    %v1355 = vpop.f32.mrb[0].mxu0
    %v1356 = vadd.f32 0.0, %v1355
    %v1357 = vpop.f32.mrb[0].mxu0
    %1358 = vdwg.mxu0
    %v1359 = vld [vmem:[%s1047 + $0x60] sm:$0xf]
    %v1360 = vld [vmem:[%s1047 + $0x64] sm:$0xf]
    %v1361 = vpack.c.bf16 %v1356, %v1353
    %v1362 = vld [vmem:[%s1047 + $0x10] sm:$0xf]
    %v1363 = vld [vmem:[%s1047 + $0x14] sm:$0xf]
    %v1364 = vld [vmem:[%s1047 + $0x18] sm:$0xf]
    %v1365 = vld [vmem:[%s1047 + $0x1c] sm:$0xf]
    %v1366 = vld [vmem:[%s1052 + $0x1] sm:$0x1]
    %v1367 = vlaneseq
    %v1368 = vshrl.u32 %v1367, 7
    %v1369 = vsub.s32 0, %v1368
    %v1370 = vrot.slane %v1366, %v1369
    %v1375 = vunpack.c.l.b16 %v1362
    %v1376 = vunpack.c.l.b16 %v1363
    %v1377 = vunpack.c.l.b16 %v1364
    %v1378 = vunpack.c.l.b16 %v1365
    %v1379 = vpack.c.b16 %v1376, %v1375
    %v1380 = vpack.c.b16 %v1378, %v1377
    %1383 = vmatprep.subr.bf16.mxu0 0
    %1384 = vmatpush1.bf16.msra.mxu0 %v1379
    %1385 = vmatprep.subr.bf16.mxu0 0
    %1386 = vmatpush1.bf16.msra.mxu0 %v1380
    %1387 = vmatprep.subr.bf16.mxu0 0
    %1388 = vmatpush1.bf16.msra.mxu0 0
    %1389 = vmatprep.subr.bf16.mxu0 0
    %1390 = vmatpush1.bf16.msra.mxu0 0
    %1391 = vmatprep.subr.bf16.mxu0 0
    %1392 = vmatpush1.bf16.msra.mxu0 0
    %1393 = vmatprep.subr.bf16.mxu0 0
    %1394 = vmatpush1.bf16.msra.mxu0 0
    %1395 = vmatprep.subr.bf16.mxu0 0
    %1396 = vmatpush1.bf16.msra.mxu0 0
    %1397 = vmatprep.subr.bf16.mxu0 0
    %1398 = vmatpush1.bf16.msra.mxu0 0
    %1399 = vmatprep.subr.bf16.mxu0 0
    %1400 = vmatpush1.bf16.msra.mxu0 0
    %1401 = vmatprep.subr.bf16.mxu0 0
    %1402 = vmatpush1.bf16.msra.mxu0 0
    %1403 = vmatprep.subr.bf16.mxu0 0
    %1404 = vmatpush1.bf16.msra.mxu0 0
    %1405 = vmatprep.subr.bf16.mxu0 0
    %1406 = vmatpush1.bf16.msra.mxu0 0
    %1407 = vmatprep.subr.bf16.mxu0 0
    %1408 = vmatpush1.bf16.msra.mxu0 0
    %1409 = vmatprep.subr.bf16.mxu0 0
    %1410 = vmatpush1.bf16.msra.mxu0 0
    %1411 = vmatprep.subr.bf16.mxu0 0
    %1412 = vmatpush1.bf16.msra.mxu0 0
    %1413 = vmatprep.subr.bf16.mxu0 0
    %1414 = vmatpush1.bf16.msra.mxu0 0
    %1415 = vmatprep.mubr.bf16.mxu0 0
    %1416 = vmatmul.mubr.bf16.gmra.mrb[0].mxu0 %v1071
    %v1417 = vpop.f32.mrb[0].mxu0
    %v1418 = vadd.f32 %v1370, %v1417
    %v1419 = vpop.f32.mrb[0].mxu0
    %v1420 = vpop.f32.mrb[0].mxu0
    %v1421 = vadd.f32 %v1370, %v1420
    %v1422 = vpop.f32.mrb[0].mxu0
    %1423 = vdwg.mxu0
    %v1424 = vld [vmem:[%s1047 + $0x30] sm:$0xf]
    %v1425 = vld [vmem:[%s1047 + $0x34] sm:$0xf]
    %v1426 = vld [vmem:[%s1047 + $0x38] sm:$0xf]
    %v1427 = vld [vmem:[%s1047 + $0x3c] sm:$0xf]
    %v1428 = vld [vmem:[%s1052 + $0x3] sm:$0x1]
    %v1429 = vlaneseq
    %v1430 = vshrl.u32 %v1429, 7
    %v1431 = vsub.s32 0, %v1430
    %v1432 = vrot.slane %v1428, %v1431
    %v1437 = vunpack.c.l.b16 %v1424
    %v1438 = vunpack.c.l.b16 %v1425
    %v1439 = vunpack.c.l.b16 %v1426
    %v1440 = vunpack.c.l.b16 %v1427
    %v1441 = vpack.c.b16 %v1438, %v1437
    %v1442 = vpack.c.b16 %v1440, %v1439
    %1445 = vmatprep.subr.bf16.mxu0 0
    %1446 = vmatpush1.bf16.msra.mxu0 %v1441
    %1447 = vmatprep.subr.bf16.mxu0 0
    %1448 = vmatpush1.bf16.msra.mxu0 %v1442
    %1449 = vmatprep.subr.bf16.mxu0 0
    %1450 = vmatpush1.bf16.msra.mxu0 0
    %1451 = vmatprep.subr.bf16.mxu0 0
    %1452 = vmatpush1.bf16.msra.mxu0 0
    %1453 = vmatprep.subr.bf16.mxu0 0
    %1454 = vmatpush1.bf16.msra.mxu0 0
    %1455 = vmatprep.subr.bf16.mxu0 0
    %1456 = vmatpush1.bf16.msra.mxu0 0
    %1457 = vmatprep.subr.bf16.mxu0 0
    %1458 = vmatpush1.bf16.msra.mxu0 0
    %1459 = vmatprep.subr.bf16.mxu0 0
    %1460 = vmatpush1.bf16.msra.mxu0 0
    %1461 = vmatprep.subr.bf16.mxu0 0
    %1462 = vmatpush1.bf16.msra.mxu0 0
    %1463 = vmatprep.subr.bf16.mxu0 0
    %1464 = vmatpush1.bf16.msra.mxu0 0
    %1465 = vmatprep.subr.bf16.mxu0 0
    %1466 = vmatpush1.bf16.msra.mxu0 0
    %1467 = vmatprep.subr.bf16.mxu0 0
    %1468 = vmatpush1.bf16.msra.mxu0 0
    %1469 = vmatprep.subr.bf16.mxu0 0
    %1470 = vmatpush1.bf16.msra.mxu0 0
    %1471 = vmatprep.subr.bf16.mxu0 0
    %1472 = vmatpush1.bf16.msra.mxu0 0
    %1473 = vmatprep.subr.bf16.mxu0 0
    %1474 = vmatpush1.bf16.msra.mxu0 0
    %1475 = vmatprep.subr.bf16.mxu0 0
    %1476 = vmatpush1.bf16.msra.mxu0 0
    %1477 = vmatprep.mubr.bf16.mxu0 0
    %1478 = vmatmul.mubr.bf16.gmra.mrb[0].mxu0 %v1071
    %v1479 = vpop.f32.mrb[0].mxu0
    %v1480 = vadd.f32 %v1432, %v1479
    %v1481 = vpop.f32.mrb[0].mxu0
    %v1482 = vpop.f32.mrb[0].mxu0
    %v1483 = vadd.f32 %v1432, %v1482
    %v1484 = vpop.f32.mrb[0].mxu0
    %1485 = vdwg.mxu0
    %v1486 = vld [vmem:[%s1047 + $0x50] sm:$0xf]
    %v1487 = vld [vmem:[%s1047 + $0x54] sm:$0xf]
    %v1488 = vld [vmem:[%s1047 + $0x58] sm:$0xf]
    %v1489 = vld [vmem:[%s1047 + $0x5c] sm:$0xf]
    %v1490 = vld [vmem:[%s1052 + $0x5] sm:$0x1]
    %v1491 = vlaneseq
    %v1492 = vshrl.u32 %v1491, 7
    %v1493 = vsub.s32 0, %v1492
    %v1494 = vrot.slane %v1490, %v1493
    %v1499 = vunpack.c.l.b16 %v1486
    %v1500 = vunpack.c.l.b16 %v1487
    %v1501 = vunpack.c.l.b16 %v1488
    %v1502 = vunpack.c.l.b16 %v1489
    %v1503 = vpack.c.b16 %v1500, %v1499
    %v1504 = vpack.c.b16 %v1502, %v1501
    %1507 = vmatprep.subr.bf16.mxu0 0
    %1508 = vmatpush1.bf16.msra.mxu0 %v1503
    %1509 = vmatprep.subr.bf16.mxu0 0
    %1510 = vmatpush1.bf16.msra.mxu0 %v1504
    %1511 = vmatprep.subr.bf16.mxu0 0
    %1512 = vmatpush1.bf16.msra.mxu0 0
    %1513 = vmatprep.subr.bf16.mxu0 0
    %1514 = vmatpush1.bf16.msra.mxu0 0
    %1515 = vmatprep.subr.bf16.mxu0 0
    %1516 = vmatpush1.bf16.msra.mxu0 0
    %1517 = vmatprep.subr.bf16.mxu0 0
    %1518 = vmatpush1.bf16.msra.mxu0 0
    %1519 = vmatprep.subr.bf16.mxu0 0
    %1520 = vmatpush1.bf16.msra.mxu0 0
    %1521 = vmatprep.subr.bf16.mxu0 0
    %1522 = vmatpush1.bf16.msra.mxu0 0
    %1523 = vmatprep.subr.bf16.mxu0 0
    %1524 = vmatpush1.bf16.msra.mxu0 0
    %1525 = vmatprep.subr.bf16.mxu0 0
    %1526 = vmatpush1.bf16.msra.mxu0 0
    %1527 = vmatprep.subr.bf16.mxu0 0
    %1528 = vmatpush1.bf16.msra.mxu0 0
    %1529 = vmatprep.subr.bf16.mxu0 0
    %1530 = vmatpush1.bf16.msra.mxu0 0
    %1531 = vmatprep.subr.bf16.mxu0 0
    %1532 = vmatpush1.bf16.msra.mxu0 0
    %1533 = vmatprep.subr.bf16.mxu0 0
    %1534 = vmatpush1.bf16.msra.mxu0 0
    %1535 = vmatprep.subr.bf16.mxu0 0
    %1536 = vmatpush1.bf16.msra.mxu0 0
    %1537 = vmatprep.subr.bf16.mxu0 0
    %1538 = vmatpush1.bf16.msra.mxu0 0
    %1539 = vmatprep.mubr.bf16.mxu0 0
    %1540 = vmatmul.mubr.bf16.gmra.mrb[0].mxu0 %v1071
    %v1541 = vpop.f32.mrb[0].mxu0
    %v1542 = vadd.f32 %v1494, %v1541
    %v1543 = vpop.f32.mrb[0].mxu0
    %v1544 = vpop.f32.mrb[0].mxu0
    %v1545 = vadd.f32 %v1494, %v1544
    %v1546 = vpop.f32.mrb[0].mxu0
    %1547 = vdwg.mxu0
    %v1548 = vpack.c.bf16 %v1421, %v1418
    %v1549 = vpack.c.bf16 %v1483, %v1480
    %v1551 = vsel %vm263, %v1548, 0
    %v1554 = vsel %vm263, %v1549, 0
    %1556 = vmatprep.subr.bf16.mxu0 0
    %1557 = vmatpush1.bf16.xpose.msra.mxu0 %v1554
    %1558 = vmatprep.subr.bf16.mxu0 0
    %1559 = vmatpush1.bf16.xpose.msra.mxu0 0
    %1560 = vmatprep.subr.bf16.mxu0 0
    %1561 = vmatpush1.bf16.xpose.msra.mxu0 0
    %1562 = vmatprep.subr.bf16.mxu0 0
    %1563 = vmatpush1.bf16.xpose.msra.mxu0 0
    %1564 = vmatprep.subr.bf16.mxu0 0
    %1565 = vmatpush1.bf16.xpose.msra.mxu0 0
    %1566 = vmatprep.subr.bf16.mxu0 0
    %1567 = vmatpush1.bf16.xpose.msra.mxu0 0
    %1568 = vmatprep.subr.bf16.mxu0 0
    %1569 = vmatpush1.bf16.xpose.msra.mxu0 0
    %1570 = vmatprep.subr.bf16.mxu0 0
    %1571 = vmatpush1.bf16.xpose.msra.mxu0 0
    %1572 = vmatprep.subr.bf16.mxu0 0
    %1573 = vmatpush1.bf16.xpose.msra.mxu0 0
    %1574 = vmatprep.subr.bf16.mxu0 0
    %1575 = vmatpush1.bf16.xpose.msra.mxu0 0
    %1576 = vmatprep.subr.bf16.mxu0 0
    %1577 = vmatpush1.bf16.xpose.msra.mxu0 0
    %1578 = vmatprep.subr.bf16.mxu0 0
    %1579 = vmatpush1.bf16.xpose.msra.mxu0 0
    %1580 = vmatprep.subr.bf16.mxu0 0
    %1581 = vmatpush1.bf16.xpose.msra.mxu0 0
    %1582 = vmatprep.subr.bf16.mxu0 0
    %1583 = vmatpush1.bf16.xpose.msra.mxu0 0
    %1584 = vmatprep.subr.bf16.mxu0 0
    %1585 = vmatpush1.bf16.xpose.msra.mxu0 0
    %1586 = vmatprep.subr.bf16.mxu0 0
    %1587 = vmatpush1.bf16.xpose.msra.mxu0 0
    %1588 = vmatprep.mubr.bf16.mxu0 0
    %1589 = vmatmul.mubr.bf16.gmra.mrb[0].mxu0 %v1551
    %v1590 = vpop.f32.mrb[0].mxu0
    %v1591 = vadd.f32 0.0, %v1590
    %v1592 = vpop.f32.mrb[0].mxu0
    %v1593 = vpop.f32.mrb[0].mxu0
    %v1594 = vadd.f32 0.0, %v1593
    %v1595 = vpop.f32.mrb[0].mxu0
    %1596 = vdwg.mxu0
    %v1597 = vmul.f32 %v1591, 0.25
    %v1598 = vmul.f32 %v1594, 0.25
    %v1599 = vadd.f32 %v1597, %v69
    %v1600 = vadd.f32 %v1598, %v70
    %v1601 = vsel %vm263, %v1599, -inf
    %1602 = vmax.xlane.f32.xlu0 %v1601
    %v1603 = vpop.xlane.xlu0 %1602
    %v1604 = vsel %vm263, %v1600, -inf
    %1605 = vmax.xlane.f32.xlu0 %v1604
    %v1606 = vpop.xlane.xlu0 %1605
    %v1607 = vsub.f32 %v1599, %v1603
    %v1608 = vsub.f32 %v1600, %v1606
    %v1609 = vmul.f32 %v1607, 1.442695
    %v1610 = vpow.pop %v1609
    %v1611 = vmul.f32 %v1608, 1.442695
    %v1612 = vpow.pop %v1611
    %v1613 = vsel %vm263, %v1610, 0.0
    %1614 = vadd.xlane.f32.xlu0 %v1613
    %v1615 = vpop.xlane.xlu0 %1614
    %v1616 = vsel %vm263, %v1612, 0.0
    %1617 = vadd.xlane.f32.xlu0 %v1616
    %v1618 = vpop.xlane.xlu0 %1617
    %v1619 = vrcp.pop %v1615
    %v1620 = vrcp.pop %v1618
    %v1621 = vmul.f32 %v1610, %v1619
    %v1622 = vmul.f32 %v1612, %v1620
    %v1623 = vpack.c.bf16 %v1622, %v1621
    %v1624 = vpack.c.bf16 %v1545, %v1542
    %v1626 = vsel %vm263, %v1623, 0
    %1628 = vmatprep.subr.bf16.mxu0 0
    %1629 = vmatpush1.bf16.msra.mxu0 %v1624
    %1630 = vmatprep.subr.bf16.mxu0 0
    %1631 = vmatpush1.bf16.msra.mxu0 0
    %1632 = vmatprep.subr.bf16.mxu0 0
    %1633 = vmatpush1.bf16.msra.mxu0 0
    %1634 = vmatprep.subr.bf16.mxu0 0
    %1635 = vmatpush1.bf16.msra.mxu0 0
    %1636 = vmatprep.subr.bf16.mxu0 0
    %1637 = vmatpush1.bf16.msra.mxu0 0
    %1638 = vmatprep.subr.bf16.mxu0 0
    %1639 = vmatpush1.bf16.msra.mxu0 0
    %1640 = vmatprep.subr.bf16.mxu0 0
    %1641 = vmatpush1.bf16.msra.mxu0 0
    %1642 = vmatprep.subr.bf16.mxu0 0
    %1643 = vmatpush1.bf16.msra.mxu0 0
    %1644 = vmatprep.subr.bf16.mxu0 0
    %1645 = vmatpush1.bf16.msra.mxu0 0
    %1646 = vmatprep.subr.bf16.mxu0 0
    %1647 = vmatpush1.bf16.msra.mxu0 0
    %1648 = vmatprep.subr.bf16.mxu0 0
    %1649 = vmatpush1.bf16.msra.mxu0 0
    %1650 = vmatprep.subr.bf16.mxu0 0
    %1651 = vmatpush1.bf16.msra.mxu0 0
    %1652 = vmatprep.subr.bf16.mxu0 0
    %1653 = vmatpush1.bf16.msra.mxu0 0
    %1654 = vmatprep.subr.bf16.mxu0 0
    %1655 = vmatpush1.bf16.msra.mxu0 0
    %1656 = vmatprep.subr.bf16.mxu0 0
    %1657 = vmatpush1.bf16.msra.mxu0 0
    %1658 = vmatprep.subr.bf16.mxu0 0
    %1659 = vmatpush1.bf16.msra.mxu0 0
    %1660 = vmatprep.mubr.bf16.mxu0 0
    %1661 = vmatmul.mubr.bf16.gmra.mrb[0].mxu0 %v1626
    %v1662 = vpop.f32.mrb[0].mxu0
    %v1663 = vadd.f32 0.0, %v1662
    %v1664 = vpop.f32.mrb[0].mxu0
    %v1665 = vpop.f32.mrb[0].mxu0
    %v1666 = vadd.f32 0.0, %v1665
    %v1667 = vpop.f32.mrb[0].mxu0
    %1668 = vdwg.mxu0
    %v1669 = vld [vmem:[%s1047 + $0x68] sm:$0xf]
    %v1670 = vld [vmem:[%s1047 + $0x6c] sm:$0xf]
    %v1671 = vpack.c.bf16 %v1666, %v1663
    %v1674 = vunpack.c.l.b16 %v1669
    %v1675 = vunpack.c.l.b16 %v1670
    %v1676 = vpack.c.b16 %v1675, %v1674
    %v1679 = vsel %vm263, %v1671, 0
    %1681 = vmatprep.subr.bf16.mxu0 0
    %1682 = vmatpush1.bf16.msra.mxu0 %v1676
    %1683 = vmatprep.subr.bf16.mxu0 0
    %1684 = vmatpush1.bf16.msra.mxu0 0
    %1685 = vmatprep.subr.bf16.mxu0 0
    %1686 = vmatpush1.bf16.msra.mxu0 0
    %1687 = vmatprep.subr.bf16.mxu0 0
    %1688 = vmatpush1.bf16.msra.mxu0 0
    %1689 = vmatprep.subr.bf16.mxu0 0
    %1690 = vmatpush1.bf16.msra.mxu0 0
    %1691 = vmatprep.subr.bf16.mxu0 0
    %1692 = vmatpush1.bf16.msra.mxu0 0
    %1693 = vmatprep.subr.bf16.mxu0 0
    %1694 = vmatpush1.bf16.msra.mxu0 0
    %1695 = vmatprep.subr.bf16.mxu0 0
    %1696 = vmatpush1.bf16.msra.mxu0 0
    %1697 = vmatprep.subr.bf16.mxu0 0
    %1698 = vmatpush1.bf16.msra.mxu0 0
    %1699 = vmatprep.subr.bf16.mxu0 0
    %1700 = vmatpush1.bf16.msra.mxu0 0
    %1701 = vmatprep.subr.bf16.mxu0 0
    %1702 = vmatpush1.bf16.msra.mxu0 0
    %1703 = vmatprep.subr.bf16.mxu0 0
    %1704 = vmatpush1.bf16.msra.mxu0 0
    %1705 = vmatprep.subr.bf16.mxu0 0
    %1706 = vmatpush1.bf16.msra.mxu0 0
    %1707 = vmatprep.subr.bf16.mxu0 0
    %1708 = vmatpush1.bf16.msra.mxu0 0
    %1709 = vmatprep.subr.bf16.mxu0 0
    %1710 = vmatpush1.bf16.msra.mxu0 0
    %1711 = vmatprep.subr.bf16.mxu0 0
    %1712 = vmatpush1.bf16.msra.mxu0 0
    %1713 = vmatprep.mubr.bf16.mxu0 0
    %1714 = vmatmul.mubr.bf16.gmra.mrb[0].mxu0 %v1679
    %v1715 = vpop.f32.mrb[0].mxu0
    %v1716 = vadd.f32 0.0, %v1715
    %v1717 = vpop.f32.mrb[0].mxu0
    %v1718 = vpop.f32.mrb[0].mxu0
    %v1719 = vadd.f32 0.0, %v1718
    %v1720 = vpop.f32.mrb[0].mxu0
    %1721 = vdwg.mxu0
    %v1724 = vunpack.c.l.b16 %v1359
    %v1725 = vunpack.c.l.b16 %v1360
    %v1726 = vpack.c.b16 %v1725, %v1724
    %v1729 = vsel %vm263, %v1361, 0
    %1731 = vmatprep.subr.bf16.mxu0 0
    %1732 = vmatpush1.bf16.msra.mxu0 %v1726
    %1733 = vmatprep.subr.bf16.mxu0 0
    %1734 = vmatpush1.bf16.msra.mxu0 0
    %1735 = vmatprep.subr.bf16.mxu0 0
    %1736 = vmatpush1.bf16.msra.mxu0 0
    %1737 = vmatprep.subr.bf16.mxu0 0
    %1738 = vmatpush1.bf16.msra.mxu0 0
    %1739 = vmatprep.subr.bf16.mxu0 0
    %1740 = vmatpush1.bf16.msra.mxu0 0
    %1741 = vmatprep.subr.bf16.mxu0 0
    %1742 = vmatpush1.bf16.msra.mxu0 0
    %1743 = vmatprep.subr.bf16.mxu0 0
    %1744 = vmatpush1.bf16.msra.mxu0 0
    %1745 = vmatprep.subr.bf16.mxu0 0
    %1746 = vmatpush1.bf16.msra.mxu0 0
    %1747 = vmatprep.subr.bf16.mxu0 0
    %1748 = vmatpush1.bf16.msra.mxu0 0
    %1749 = vmatprep.subr.bf16.mxu0 0
    %1750 = vmatpush1.bf16.msra.mxu0 0
    %1751 = vmatprep.subr.bf16.mxu0 0
    %1752 = vmatpush1.bf16.msra.mxu0 0
    %1753 = vmatprep.subr.bf16.mxu0 0
    %1754 = vmatpush1.bf16.msra.mxu0 0
    %1755 = vmatprep.subr.bf16.mxu0 0
    %1756 = vmatpush1.bf16.msra.mxu0 0
    %1757 = vmatprep.subr.bf16.mxu0 0
    %1758 = vmatpush1.bf16.msra.mxu0 0
    %1759 = vmatprep.subr.bf16.mxu0 0
    %1760 = vmatpush1.bf16.msra.mxu0 0
    %1761 = vmatprep.subr.bf16.mxu0 0
    %1762 = vmatpush1.bf16.msra.mxu0 0
    %1763 = vmatprep.mubr.bf16.mxu0 0
    %1764 = vmatmul.mubr.bf16.gmra.mrb[0].mxu0 %v1729
    %v1765 = vpop.f32.mrb[0].mxu0
    %v1766 = vadd.f32 %v1716, %v1765
    %v1767 = vpop.f32.mrb[0].mxu0
    %v1768 = vpop.f32.mrb[0].mxu0
    %v1769 = vadd.f32 %v1719, %v1768
    %v1770 = vpop.f32.mrb[0].mxu0
    %1771 = vdwg.mxu0
    %v1772 = vld [vmem:[%s1052 + $0x6] sm:$0x1]
    %v1773 = vlaneseq
    %v1774 = vshrl.u32 %v1773, 7
    %v1775 = vsub.s32 0, %v1774
    %v1776 = vrot.slane %v1772, %v1775
    %v1777 = vadd.f32 %v1766, %v1776
    %v1778 = vadd.f32 %v1769, %v1776
    %v1779 = vadd.f32 %v1777, %v1044
    %v1780 = vadd.f32 %v1778, %v1045
    %v1781 = vld [vmem:[%s1052 + $0x7] sm:$0x1]
    %v1782 = vld [vmem:[%s1052 + $0x8] sm:$0x1]
    %v1783 = vsel %vm29, %v1779, 0.0
    %1784 = vadd.xlane.f32.xlu0 %v1783
    %v1785 = vpop.xlane.xlu0 %1784
    %v1786 = vsel %vm29, %v1780, 0.0
    %1787 = vadd.xlane.f32.xlu0 %v1786
    %v1788 = vpop.xlane.xlu0 %1787
    %v1789 = vmul.f32 %v1785, %v36
    %v1790 = vmul.f32 %v1788, %v36
    %v1791 = vsub.f32 %v1779, %v1789
    %v1792 = vsub.f32 %v1780, %v1790
    %v1793 = vmul.f32 %v1791, %v1791
    %v1794 = vmul.f32 %v1792, %v1792
    %v1795 = vsel %vm29, %v1793, 0.0
    %1796 = vadd.xlane.f32.xlu0 %v1795
    %v1797 = vpop.xlane.xlu0 %1796
    %v1798 = vsel %vm29, %v1794, 0.0
    %1799 = vadd.xlane.f32.xlu0 %v1798
    %v1800 = vpop.xlane.xlu0 %1799
    %v1801 = vmul.f32 %v1797, %v36
    %v1802 = vmul.f32 %v1800, %v36
    %v1803 = vadd.f32 %v1801, 1e-12
    %v1804 = vadd.f32 %v1802, 1e-12
    %v1805 = vrsqrt.pop %v1803
    %v1806 = vrsqrt.pop %v1804
    %v1807 = vmul.f32 %v1791, %v1805
    %v1808 = vmul.f32 %v1792, %v1806
    %v1809 = vlaneseq
    %v1810 = vshrl.u32 %v1809, 7
    %v1811 = vsub.s32 0, %v1810
    %v1812 = vrot.slane %v1781, %v1811
    %v1813 = vmul.f32 %v1807, %v1812
    %v1814 = vmul.f32 %v1808, %v1812
    %v1815 = vlaneseq
    %v1816 = vshrl.u32 %v1815, 7
    %v1817 = vsub.s32 0, %v1816
    %v1818 = vrot.slane %v1782, %v1817
    %v1819 = vadd.f32 %v1813, %v1818
    %v1820 = vadd.f32 %v1814, %v1818
    %v1821 = vld [vmem:[%s1047 + $0x70] sm:$0xf]
    %v1822 = vld [vmem:[%s1047 + $0x74] sm:$0xf]
    %v1823 = vld [vmem:[%s1047 + $0x78] sm:$0xf]
    %v1824 = vld [vmem:[%s1047 + $0x7c] sm:$0xf]
    %v1825 = vpack.c.bf16 %v1820, %v1819
    %v1826 = vld [vmem:[%s1052 + $0x9] sm:$0x1]
    %v1827 = vlaneseq
    %v1828 = vshrl.u32 %v1827, 7
    %v1829 = vsub.s32 0, %v1828
    %v1830 = vrot.slane %v1826, %v1829
    %v1835 = vunpack.c.l.b16 %v1821
    %v1836 = vunpack.c.l.b16 %v1822
    %v1837 = vunpack.c.l.b16 %v1823
    %v1838 = vunpack.c.l.b16 %v1824
    %v1839 = vpack.c.b16 %v1836, %v1835
    %v1840 = vpack.c.b16 %v1838, %v1837
    %v1844 = vsel %vm29, %v1825, 0
    %1846 = vmatprep.subr.bf16.mxu0 0
    %1847 = vmatpush1.bf16.msra.mxu0 %v1839
    %1848 = vmatprep.subr.bf16.mxu0 0
    %1849 = vmatpush1.bf16.msra.mxu0 %v1840
    %1850 = vmatprep.subr.bf16.mxu0 0
    %1851 = vmatpush1.bf16.msra.mxu0 0
    %1852 = vmatprep.subr.bf16.mxu0 0
    %1853 = vmatpush1.bf16.msra.mxu0 0
    %1854 = vmatprep.subr.bf16.mxu0 0
    %1855 = vmatpush1.bf16.msra.mxu0 0
    %1856 = vmatprep.subr.bf16.mxu0 0
    %1857 = vmatpush1.bf16.msra.mxu0 0
    %1858 = vmatprep.subr.bf16.mxu0 0
    %1859 = vmatpush1.bf16.msra.mxu0 0
    %1860 = vmatprep.subr.bf16.mxu0 0
    %1861 = vmatpush1.bf16.msra.mxu0 0
    %1862 = vmatprep.subr.bf16.mxu0 0
    %1863 = vmatpush1.bf16.msra.mxu0 0
    %1864 = vmatprep.subr.bf16.mxu0 0
    %1865 = vmatpush1.bf16.msra.mxu0 0
    %1866 = vmatprep.subr.bf16.mxu0 0
    %1867 = vmatpush1.bf16.msra.mxu0 0
    %1868 = vmatprep.subr.bf16.mxu0 0
    %1869 = vmatpush1.bf16.msra.mxu0 0
    %1870 = vmatprep.subr.bf16.mxu0 0
    %1871 = vmatpush1.bf16.msra.mxu0 0
    %1872 = vmatprep.subr.bf16.mxu0 0
    %1873 = vmatpush1.bf16.msra.mxu0 0
    %1874 = vmatprep.subr.bf16.mxu0 0
    %1875 = vmatpush1.bf16.msra.mxu0 0
    %1876 = vmatprep.subr.bf16.mxu0 0
    %1877 = vmatpush1.bf16.msra.mxu0 0
    %1878 = vmatprep.mubr.bf16.mxu0 0
    %1879 = vmatmul.mubr.bf16.gmra.mrb[0].mxu0 %v1844
    %v1880 = vpop.f32.mrb[0].mxu0
    %v1881 = vadd.f32 %v1830, %v1880
    %v1882 = vpop.f32.mrb[0].mxu0
    %v1883 = vpop.f32.mrb[0].mxu0
    %v1884 = vadd.f32 %v1830, %v1883
    %v1885 = vpop.f32.mrb[0].mxu0
    %1886 = vdwg.mxu0
    %v1887 = vmul.f32 %v1881, 0.5
    %v1888 = vmul.f32 %v1884, 0.5
    %v1889 = vmul.f32 %v1881, 0.70710677
    %v1890 = vmul.f32 %v1884, 0.70710677
    %v1891 = verf.f32.pop %v1889
    %v1892 = verf.f32.pop %v1890
    %v1893 = vadd.f32 %v1891, 1.0
    %v1894 = vadd.f32 %v1892, 1.0
    %v1895 = vmul.f32 %v1887, %v1893
    %v1896 = vmul.f32 %v1888, %v1894
    %v1897 = vld [vmem:[%s1047 + $0x80] sm:$0xf]
    %v1898 = vld [vmem:[%s1047 + $0x84] sm:$0xf]
    %v1899 = vld [vmem:[%s1047 + $0x88] sm:$0xf]
    %v1900 = vld [vmem:[%s1047 + $0x8c] sm:$0xf]
    %v1901 = vld [vmem:[%s1047 + $0x90] sm:$0xf]
    %v1902 = vld [vmem:[%s1047 + $0x94] sm:$0xf]
    %v1903 = vld [vmem:[%s1047 + $0x98] sm:$0xf]
    %v1904 = vld [vmem:[%s1047 + $0x9c] sm:$0xf]
    %v1905 = vpack.c.bf16 %v1896, %v1895
    %v1906 = vld [vmem:[%s1052 + $0xa] sm:$0x1]
    %v1907 = vlaneseq
    %v1908 = vshrl.u32 %v1907, 7
    %v1909 = vsub.s32 0, %v1908
    %v1910 = vrot.slane %v1906, %v1909
    %v1919 = vunpack.c.l.b16 %v1897
    %v1920 = vunpack.c.l.b16 %v1898
    %v1921 = vunpack.c.l.b16 %v1899
    %v1922 = vunpack.c.l.b16 %v1900
    %v1923 = vunpack.c.l.b16 %v1901
    %v1924 = vunpack.c.l.b16 %v1902
    %v1925 = vunpack.c.l.b16 %v1903
    %v1926 = vunpack.c.l.b16 %v1904
    %v1927 = vpack.c.b16 %v1920, %v1919
    %v1928 = vpack.c.b16 %v1922, %v1921
    %v1929 = vpack.c.b16 %v1924, %v1923
    %v1930 = vpack.c.b16 %v1926, %v1925
    %v1936 = vsel %vm959, %v1905, 0
    %1938 = vmatprep.subr.bf16.mxu0 0
    %1939 = vmatpush1.bf16.msra.mxu0 %v1927
    %1940 = vmatprep.subr.bf16.mxu0 0
    %1941 = vmatpush1.bf16.msra.mxu0 %v1928
    %1942 = vmatprep.subr.bf16.mxu0 0
    %1943 = vmatpush1.bf16.msra.mxu0 %v1929
    %1944 = vmatprep.subr.bf16.mxu0 0
    %1945 = vmatpush1.bf16.msra.mxu0 %v1930
    %1946 = vmatprep.subr.bf16.mxu0 0
    %1947 = vmatpush1.bf16.msra.mxu0 0
    %1948 = vmatprep.subr.bf16.mxu0 0
    %1949 = vmatpush1.bf16.msra.mxu0 0
    %1950 = vmatprep.subr.bf16.mxu0 0
    %1951 = vmatpush1.bf16.msra.mxu0 0
    %1952 = vmatprep.subr.bf16.mxu0 0
    %1953 = vmatpush1.bf16.msra.mxu0 0
    %1954 = vmatprep.subr.bf16.mxu0 0
    %1955 = vmatpush1.bf16.msra.mxu0 0
    %1956 = vmatprep.subr.bf16.mxu0 0
    %1957 = vmatpush1.bf16.msra.mxu0 0
    %1958 = vmatprep.subr.bf16.mxu0 0
    %1959 = vmatpush1.bf16.msra.mxu0 0
    %1960 = vmatprep.subr.bf16.mxu0 0
    %1961 = vmatpush1.bf16.msra.mxu0 0
    %1962 = vmatprep.subr.bf16.mxu0 0
    %1963 = vmatpush1.bf16.msra.mxu0 0
    %1964 = vmatprep.subr.bf16.mxu0 0
    %1965 = vmatpush1.bf16.msra.mxu0 0
    %1966 = vmatprep.subr.bf16.mxu0 0
    %1967 = vmatpush1.bf16.msra.mxu0 0
    %1968 = vmatprep.subr.bf16.mxu0 0
    %1969 = vmatpush1.bf16.msra.mxu0 0
    %1970 = vmatprep.mubr.bf16.mxu0 0
    %1971 = vmatmul.mubr.bf16.gmra.mrb[0].mxu0 %v1936
    %v1972 = vpop.f32.mrb[0].mxu0
    %v1973 = vadd.f32 %v1910, %v1972
    %v1974 = vpop.f32.mrb[0].mxu0
    %v1975 = vpop.f32.mrb[0].mxu0
    %v1976 = vadd.f32 %v1910, %v1975
    %v1977 = vpop.f32.mrb[0].mxu0
    %1978 = vdwg.mxu0
    %v1979 = vadd.f32 %v1973, %v1819
    %v1980 = vadd.f32 %v1976, %v1820
    %v1981 = vld [vmem:[%s1052 + $0xb] sm:$0x1]
    %v1982 = vld [vmem:[%s1052 + $0xc] sm:$0x1]
    %v1983 = vsel %vm29, %v1979, 0.0
    %1984 = vadd.xlane.f32.xlu0 %v1983
    %v1985 = vpop.xlane.xlu0 %1984
    %v1986 = vsel %vm29, %v1980, 0.0
    %1987 = vadd.xlane.f32.xlu0 %v1986
    %v1988 = vpop.xlane.xlu0 %1987
    %v1989 = vmul.f32 %v1985, %v36
    %v1990 = vmul.f32 %v1988, %v36
    %v1991 = vsub.f32 %v1979, %v1989
    %v1992 = vsub.f32 %v1980, %v1990
    %v1993 = vmul.f32 %v1991, %v1991
    %v1994 = vmul.f32 %v1992, %v1992
    %v1995 = vsel %vm29, %v1993, 0.0
    %1996 = vadd.xlane.f32.xlu0 %v1995
    %v1997 = vpop.xlane.xlu0 %1996
    %v1998 = vsel %vm29, %v1994, 0.0
    %1999 = vadd.xlane.f32.xlu0 %v1998
    %v2000 = vpop.xlane.xlu0 %1999
    %v2001 = vmul.f32 %v1997, %v36
    %v2002 = vmul.f32 %v2000, %v36
    %v2003 = vadd.f32 %v2001, 1e-12
    %v2004 = vadd.f32 %v2002, 1e-12
    %v2005 = vrsqrt.pop %v2003
    %v2006 = vrsqrt.pop %v2004
    %v2007 = vmul.f32 %v1991, %v2005
    %v2008 = vmul.f32 %v1992, %v2006
    %v2009 = vlaneseq
    %v2010 = vshrl.u32 %v2009, 7
    %v2011 = vsub.s32 0, %v2010
    %v2012 = vrot.slane %v1981, %v2011
    %v2013 = vmul.f32 %v2007, %v2012
    %v2014 = vmul.f32 %v2008, %v2012
    %v2015 = vlaneseq
    %v2016 = vshrl.u32 %v2015, 7
    %v2017 = vsub.s32 0, %v2016
    %v2018 = vrot.slane %v1982, %v2017
    %v2019 = vadd.f32 %v2013, %v2018
    %v2020 = vadd.f32 %v2014, %v2018
    %v2022 = vrot.slane %v2020, 7
    %vm2024 = vcmask 1040384
    %v2025 = vsel %vm2024, %v2019, %v2022
    %v2026 = vld [vmem:[%s4] sm:$0xf]
    %v2027 = vld [vmem:[%s4 + $0x4] sm:$0xf]
    %v2028 = vld [vmem:[%s4 + $0x8] sm:$0xf]
    %v2029 = vld [vmem:[%s4 + $0xc] sm:$0xf]
    %v2030 = vpack.c.bf16 %v2025, %v2025
    %v2031 = vld [vmem:[%s5 + $0x2] sm:$0x1]
    %v2032 = vlaneseq
    %v2033 = vshrl.u32 %v2032, 7
    %v2034 = vsub.s32 0, %v2033
    %v2035 = vrot.slane %v2031, %v2034
    %v2040 = vunpack.c.l.b16 %v2026
    %v2041 = vunpack.c.l.b16 %v2027
    %v2042 = vunpack.c.l.b16 %v2028
    %v2043 = vunpack.c.l.b16 %v2029
    %v2044 = vpack.c.b16 %v2041, %v2040
    %v2045 = vpack.c.b16 %v2043, %v2042
    %v2049 = vsel %vm29, %v2030, 0
    %2051 = vmatprep.subr.bf16.mxu0 0
    %2052 = vmatpush1.bf16.msra.mxu0 %v2044
    %2053 = vmatprep.subr.bf16.mxu0 0
    %2054 = vmatpush1.bf16.msra.mxu0 %v2045
    %2055 = vmatprep.subr.bf16.mxu0 0
    %2056 = vmatpush1.bf16.msra.mxu0 0
    %2057 = vmatprep.subr.bf16.mxu0 0
    %2058 = vmatpush1.bf16.msra.mxu0 0
    %2059 = vmatprep.subr.bf16.mxu0 0
    %2060 = vmatpush1.bf16.msra.mxu0 0
    %2061 = vmatprep.subr.bf16.mxu0 0
    %2062 = vmatpush1.bf16.msra.mxu0 0
    %2063 = vmatprep.subr.bf16.mxu0 0
    %2064 = vmatpush1.bf16.msra.mxu0 0
    %2065 = vmatprep.subr.bf16.mxu0 0
    %2066 = vmatpush1.bf16.msra.mxu0 0
    %2067 = vmatprep.subr.bf16.mxu0 0
    %2068 = vmatpush1.bf16.msra.mxu0 0
    %2069 = vmatprep.subr.bf16.mxu0 0
    %2070 = vmatpush1.bf16.msra.mxu0 0
    %2071 = vmatprep.subr.bf16.mxu0 0
    %2072 = vmatpush1.bf16.msra.mxu0 0
    %2073 = vmatprep.subr.bf16.mxu0 0
    %2074 = vmatpush1.bf16.msra.mxu0 0
    %2075 = vmatprep.subr.bf16.mxu0 0
    %2076 = vmatpush1.bf16.msra.mxu0 0
    %2077 = vmatprep.subr.bf16.mxu0 0
    %2078 = vmatpush1.bf16.msra.mxu0 0
    %2079 = vmatprep.subr.bf16.mxu0 0
    %2080 = vmatpush1.bf16.msra.mxu0 0
    %2081 = vmatprep.subr.bf16.mxu0 0
    %2082 = vmatpush1.bf16.msra.mxu0 0
    %2083 = vmatprep.mubr.bf16.mxu0 0
    %2084 = vmatmul.mubr.bf16.gmra.mrb[0].mxu0 %v2049
    %v2085 = vpop.f32.mrb[0].mxu0
    %v2086 = vadd.f32 %v2035, %v2085
    %v2087 = vpop.f32.mrb[0].mxu0
    %v2088 = vpop.f32.mrb[0].mxu0
    %v2089 = vpop.f32.mrb[0].mxu0
    %2090 = vdwg.mxu0
    %v2091 = vtanh.pop %v2086
    %v2092 = vld [vmem:[%s4 + $0x10] sm:$0xf]
    %v2093 = vld [vmem:[%s4 + $0x14] sm:$0xf]
    %v2094 = vld [vmem:[%s4 + $0x18] sm:$0xf]
    %v2095 = vld [vmem:[%s4 + $0x1c] sm:$0xf]
    %v2096 = vpack.c.bf16 %v2091, %v2091
    %v2097 = vld [vmem:[%s5 + $0x3] sm:$0x1]
    %v2098 = vlaneseq
    %v2099 = vshrl.u32 %v2098, 7
    %v2100 = vsub.s32 0, %v2099
    %v2101 = vrot.slane %v2097, %v2100
    %v2106 = vunpack.c.l.b16 %v2092
    %v2107 = vunpack.c.l.b16 %v2093
    %v2108 = vunpack.c.l.b16 %v2094
    %v2109 = vunpack.c.l.b16 %v2095
    %v2110 = vpack.c.b16 %v2107, %v2106
    %v2111 = vpack.c.b16 %v2109, %v2108
    %v2115 = vsel %vm29, %v2096, 0
    %2117 = vmatprep.subr.bf16.mxu0 0
    %2118 = vmatpush1.bf16.msra.mxu0 %v2110
    %2119 = vmatprep.subr.bf16.mxu0 0
    %2120 = vmatpush1.bf16.msra.mxu0 %v2111
    %2121 = vmatprep.subr.bf16.mxu0 0
    %2122 = vmatpush1.bf16.msra.mxu0 0
    %2123 = vmatprep.subr.bf16.mxu0 0
    %2124 = vmatpush1.bf16.msra.mxu0 0
    %2125 = vmatprep.subr.bf16.mxu0 0
    %2126 = vmatpush1.bf16.msra.mxu0 0
    %2127 = vmatprep.subr.bf16.mxu0 0
    %2128 = vmatpush1.bf16.msra.mxu0 0
    %2129 = vmatprep.subr.bf16.mxu0 0
    %2130 = vmatpush1.bf16.msra.mxu0 0
    %2131 = vmatprep.subr.bf16.mxu0 0
    %2132 = vmatpush1.bf16.msra.mxu0 0
    %2133 = vmatprep.subr.bf16.mxu0 0
    %2134 = vmatpush1.bf16.msra.mxu0 0
    %2135 = vmatprep.subr.bf16.mxu0 0
    %2136 = vmatpush1.bf16.msra.mxu0 0
    %2137 = vmatprep.subr.bf16.mxu0 0
    %2138 = vmatpush1.bf16.msra.mxu0 0
    %2139 = vmatprep.subr.bf16.mxu0 0
    %2140 = vmatpush1.bf16.msra.mxu0 0
    %2141 = vmatprep.subr.bf16.mxu0 0
    %2142 = vmatpush1.bf16.msra.mxu0 0
    %2143 = vmatprep.subr.bf16.mxu0 0
    %2144 = vmatpush1.bf16.msra.mxu0 0
    %2145 = vmatprep.subr.bf16.mxu0 0
    %2146 = vmatpush1.bf16.msra.mxu0 0
    %2147 = vmatprep.subr.bf16.mxu0 0
    %2148 = vmatpush1.bf16.msra.mxu0 0
    %2149 = vmatprep.mubr.bf16.mxu0 0
    %2150 = vmatmul.mubr.bf16.gmra.mrb[0].mxu0 %v2115
    %v2151 = vpop.f32.mrb[0].mxu0
    %v2152 = vadd.f32 %v2101, %v2151
    %v2153 = vpop.f32.mrb[0].mxu0
    %v2154 = vpop.f32.mrb[0].mxu0
    %v2155 = vpop.f32.mrb[0].mxu0
    %2156 = vdwg.mxu0
    %2157 = vst [vmem:[#allocation2] sm:$0x3] %v2152
    // Predicated region
    $region26: #{bert_classifier_forward.1} parent=1 // pred_check
      _
    $region27: #{bert_classifier_forward.1} parent=1 // pred_check_branch
      %2159 = sbr.rel (0) target = $region29
    $region28: #{bert_classifier_forward.1} parent=1 // pred_region
      %s2161 = ssub.s32 32, 32
      %2162 = vsyncadd [#allocation3], %s2161
      %s2164 = sshll.u32 [#allocation2], 4
      %s2165 = int_to_ptr.vmem [resolvable:$true] %s2164
      %2167 = dma.vmem_to_hbm [thread:$0]  %s2165, 32, %s6, [#allocation3]
    $region29: #{bert_classifier_forward.1} parent=1 // pred_fallthru
      _
    // Predicated region
    $region30: #{bert_classifier_forward.1} parent=1 // pred_check
      _
    $region31: #{bert_classifier_forward.1} parent=1 // pred_check_branch
      %2169 = sbr.rel (0) target = $region33
    $region32: #{bert_classifier_forward.1} parent=1 // pred_region
      %2170 = dma.done [#allocation3], 32
    $region33: #{bert_classifier_forward.1} parent=1 // pred_fallthru
      _
    %2171 = vsyncpa [#allocation3], 1

</llo_original>
